<compile_context>
chip_gen: v7x
topology: tpu7x:2x2x1
jax: 0.10.0
libtpu: 0.0.40
codegen_flags: <defaults>
</compile_context>

<pallas_src>
import functools

import jax
import jax.numpy as jnp
from jax.experimental import pallas as pl
from jax.experimental.pallas import tpu as pltpu

BN_EPS = 1e-5


# ----------------------------------------------------------------------------
# Kernel
# ----------------------------------------------------------------------------
def _lstm_head_kernel(x_ref, w_ref, b_ref, wfc_ref, bfc_ref, out_ref):
    """Per-batch-tile kernel: unrolled layer loop + fused (BN->)FC epilogue.

    Shapes (per grid step, all VMEM-resident):
      x_ref   : (TB, H)  f32    batch tile of the layer-0 input
      w_ref   : (L, H, 3H) bf16 per-layer input->hidden weights, gates [i|g|o]
                                concatenated on the lane axis (pre-transposed)
      b_ref   : (L, 1, 3H) f32  per-layer combined bias (b_ih + b_hh), [i|g|o]
      wfc_ref : (H, Cp) bf16    FC weight with eval-BatchNorm folded, lane-padded
      bfc_ref : (1, Cp) f32     FC bias with eval-BatchNorm folded, lane-padded
      out_ref : (TB, Cp) f32    lane-dense logits (valid classes in [:, :C])
    """
    n_layers = w_ref.shape[0]
    H = x_ref.shape[1]

    h = x_ref[...]                                   # f32 activations
    for l in range(n_layers):  # static unroll (L small, known at trace time)
        # One lane-dense bf16 MXU matmul for all three live gates, f32 acc.
        gates = (jnp.dot(h.astype(jnp.bfloat16), w_ref[l],
                         preferred_element_type=jnp.float32)
                 + b_ref[l])
        i_g = jax.nn.sigmoid(gates[:, 0 * H:1 * H])
        g_g = jnp.tanh(gates[:, 1 * H:2 * H])
        o_g = jax.nn.sigmoid(gates[:, 2 * H:3 * H])
        # c_prev == 0  =>  c = i * g  (forget gate eliminated).
        c = i_g * g_g
        h = o_g * jnp.tanh(c)

    # BatchNorm1d (eval) is folded into wfc/bfc in the wrapper.
    # TODO(synk): nn.Dropout is stochastic in train mode; identity in eval.
    out_ref[...] = (jnp.dot(h.astype(jnp.bfloat16), wfc_ref[...],
                            preferred_element_type=jnp.float32)
                    + bfc_ref[...])


# ----------------------------------------------------------------------------
# Parameter packing
# ----------------------------------------------------------------------------
def pack_lstm_weights(w_ih, b_ih, b_hh):
    """Repack PyTorch-layout LSTM params into the kernel layout.

    w_ih : (L, 4H, H)  rows in PyTorch gate order i, f, g, o
    b_ih : (L, 4H)
    b_hh : (L, 4H)     (W_hh multiplies h_prev == 0; only its bias matters)

    Returns:
      w_gio : (L, H, 3H) bf16  transposed, gates [i|g|o] on the lane axis
      b_gio : (L, 1, 3H) f32   combined bias b_ih + b_hh for gates [i|g|o]
    """
    L, four_h, H = w_ih.shape
    assert four_h == 4 * H
    w4 = w_ih.reshape(L, 4, H, H)            # (L, gate, H_out, H_in)
    b4 = (b_ih + b_hh).reshape(L, 4, H)      # (L, gate, H)
    gio = (0, 2, 3)                          # i, g, o (forget gate is dead)
    w_gio = jnp.concatenate(
        [jnp.transpose(w4[:, k], (0, 2, 1)) for k in gio], axis=-1)  # (L, H, 3H)
    b_gio = jnp.concatenate([b4[:, k] for k in gio], axis=-1)[:, None, :]
    return w_gio.astype(jnp.bfloat16), b_gio.astype(jnp.float32)


def fold_bn_into_fc(gamma, beta, rmean, rvar, w_fc, b_fc):
    """Fold eval-mode BatchNorm1d into the Linear layer and lane-pad to 128.

    Returns wfc_p (H, Cp) bf16, bfc_p (1, Cp) f32 with Cp a multiple of 128.
    """
    scale = gamma * jax.lax.rsqrt(rvar + BN_EPS)   # (H,)
    shift = beta - rmean * scale                   # (H,)
    wfc = w_fc.T                                   # (H, C)
    wfc_f = scale[:, None] * wfc                   # (H, C)
    bfc_f = shift @ wfc + b_fc                     # (C,)
    H, C = wfc_f.shape
    Cp = max(128, ((C + 127) // 128) * 128)
    wfc_p = jnp.zeros((H, Cp), jnp.float32).at[:, :C].set(wfc_f)
    bfc_p = jnp.zeros((1, Cp), jnp.float32).at[:, :C].set(bfc_f)
    return wfc_p.astype(jnp.bfloat16), bfc_p.astype(jnp.float32)


# ----------------------------------------------------------------------------
# Wrapper
# ----------------------------------------------------------------------------
@functools.partial(jax.jit, static_argnames=("num_classes",))
def lstm_forward(x, w_gio, b_gio, wfc_p, bfc_p, *, num_classes):
    """x: (B, H) single-timestep input. Returns (B, num_classes) logits."""
    B, H = x.shape
    L = w_gio.shape[0]
    Cp = wfc_p.shape[1]
    assert w_gio.shape == (L, H, 3 * H)
    assert b_gio.shape == (L, 1, 3 * H)
    assert bfc_p.shape == (1, Cp)

    # Batch tiling: 128-row tiles for large batches (parallel grid across
    # TensorCores / pipelined activation DMA); pad small batches to 8 rows.
    if B >= 128:
        TB = 128
    else:
        TB = max(8, ((B + 7) // 8) * 8)
    Bp = ((B + TB - 1) // TB) * TB
    if Bp != B:
        x = jnp.pad(x, ((0, Bp - B), (0, 0)))

    out_padded = pl.pallas_call(
        _lstm_head_kernel,
        out_shape=jax.ShapeDtypeStruct((Bp, Cp), jnp.float32),
        grid=(Bp // TB,),
        in_specs=[
            pl.BlockSpec((TB, H), lambda i: (i, 0)),          # activations
            pl.BlockSpec((L, H, 3 * H), lambda i: (0, 0, 0)),  # weights: constant
            pl.BlockSpec((L, 1, 3 * H), lambda i: (0, 0, 0)),  # across the grid
            pl.BlockSpec((H, Cp), lambda i: (0, 0)),
            pl.BlockSpec((1, Cp), lambda i: (0, 0)),
        ],
        out_specs=pl.BlockSpec((TB, Cp), lambda i: (i, 0)),
        compiler_params=pltpu.CompilerParams(
            dimension_semantics=("parallel",),
            vmem_limit_bytes=32 * 1024 * 1024,
        ),
    )(x, w_gio, b_gio, wfc_p, bfc_p)

    return out_padded[:B, :num_classes]


# ----------------------------------------------------------------------------
# Pure-JAX reference mirroring the PyTorch eval-mode forward (full 4 gates,
# separate BatchNorm, un-padded FC, all f32) to validate the repack/fold.
# ----------------------------------------------------------------------------
def reference(x, w_ih, b_ih, b_hh, gamma, beta, rmean, rvar, w_fc, b_fc):
    B, H = x.shape
    L = w_ih.shape[0]
    h = x
    for l in range(L):
        # seq_len == 1, zero initial states: h_prev = c_prev = 0.
        gates = h @ w_ih[l].T + b_ih[l] + b_hh[l]
        i = jax.nn.sigmoid(gates[:, 0 * H:1 * H])
        f = jax.nn.sigmoid(gates[:, 1 * H:2 * H])
        g = jnp.tanh(gates[:, 2 * H:3 * H])
        o = jax.nn.sigmoid(gates[:, 3 * H:4 * H])
        c = f * 0.0 + i * g
        h = o * jnp.tanh(c)
    y = (h - rmean) * jax.lax.rsqrt(rvar + BN_EPS) * gamma + beta
    return y @ w_fc.T + b_fc


if __name__ == "__main__":
    # Shapes consistent with the module: input_dim = hidden = 128,
    # num_classes = 10, n_layers = 2.  Batch = 256 to exercise the 128-row
    # batch grid (2 parallel tiles) per the perf review.
    B, H, C, L = 256, 128, 10, 2

    key = jax.random.PRNGKey(0)
    keys = jax.random.split(key, 12)

    x = jax.random.normal(keys[0], (B, H), dtype=jnp.float32)

    # PyTorch nn.LSTM params per layer: W_ih (4H, H_in), W_hh (4H, H),
    # b_ih (4H), b_hh (4H).  W_hh multiplies h_prev == 0 and is omitted.
    scale = 1.0 / jnp.sqrt(H)
    w_ih = jax.random.uniform(keys[1], (L, 4 * H, H), minval=-scale, maxval=scale)
    b_ih = jax.random.uniform(keys[2], (L, 4 * H), minval=-scale, maxval=scale)
    b_hh = jax.random.uniform(keys[3], (L, 4 * H), minval=-scale, maxval=scale)

    # BatchNorm1d affine params / running stats (deterministic, nontrivial).
    gamma = jax.random.uniform(keys[4], (H,), minval=0.5, maxval=1.5)
    beta = jax.random.normal(keys[5], (H,)) * 0.1
    rmean = jax.random.normal(keys[6], (H,)) * 0.1
    rvar = jax.random.uniform(keys[7], (H,), minval=0.5, maxval=1.5)

    # Linear(hidden, num_classes): PyTorch weight is (C, H), bias (C,).
    w_fc = jax.random.uniform(keys[8], (C, H), minval=-scale, maxval=scale)
    b_fc = jax.random.uniform(keys[9], (C,), minval=-scale, maxval=scale)

    # Pack params for the kernel (bf16 weights, f32 biases).
    w_gio, b_gio = pack_lstm_weights(w_ih, b_ih, b_hh)
    wfc_p, bfc_p = fold_bn_into_fc(gamma, beta, rmean, rvar, w_fc, b_fc)

    out = lstm_forward(x, w_gio, b_gio, wfc_p, bfc_p, num_classes=C)
    out = jax.block_until_ready(out)

    ref = reference(x, w_ih, b_ih, b_hh, gamma, beta, rmean, rvar, w_fc, b_fc)
    assert out.shape == (B, C), out.shape
    # bf16 matmul operands => relaxed tolerance (per perf review).
    assert jnp.allclose(out, ref, atol=2e-2, rtol=2e-2), (
        f"max abs err {jnp.max(jnp.abs(out - ref))}")

    print("KERNEL_OK")
</pallas_src>

<mosaic_0001>
module attributes {stable_mosaic.version = 11 : i64} {
  func.func @_lstm_head_kernel(%arg0: i32, %arg1: memref<128x128xf32, #tpu.memory_space<vmem>>, %arg2: memref<2x128x384xbf16, #tpu.memory_space<vmem>>, %arg3: memref<2x1x384xf32, #tpu.memory_space<vmem>>, %arg4: memref<128x128xbf16, #tpu.memory_space<vmem>>, %arg5: memref<1x128xf32, #tpu.memory_space<vmem>>, %arg6: memref<128x128xf32, #tpu.memory_space<vmem>>) attributes {dimension_semantics = [#tpu.dimension_semantics<parallel>], iteration_bounds = array<i64: 2>, scalar_prefetch = 0 : i64, scratch_operands = 0 : i64, tpu.core_type = #tpu.core_type<tc>, window_params = [{transform_indices = @transform_0, window_bounds = array<i64: 128, 128>}, {pipeline_mode = #tpu.pipeline_mode<synchronous>, transform_indices = @transform_1, window_bounds = array<i64: 2, 128, 384>}, {pipeline_mode = #tpu.pipeline_mode<synchronous>, transform_indices = @transform_2, window_bounds = array<i64: 2, 1, 384>}, {pipeline_mode = #tpu.pipeline_mode<synchronous>, transform_indices = @transform_3, window_bounds = array<i64: 128, 128>}, {pipeline_mode = #tpu.pipeline_mode<synchronous>, transform_indices = @transform_4, window_bounds = array<i64: 1, 128>}, {transform_indices = @transform_5, window_bounds = array<i64: 128, 128>}]} {
    %c0 = arith.constant 0 : index
    %c0_0 = arith.constant 0 : index
    %0 = vector.load %arg1[%c0, %c0_0] : memref<128x128xf32, #tpu.memory_space<vmem>>, vector<128x128xf32>
    %1 = arith.truncf %0 : vector<128x128xf32> to vector<128x128xbf16>
    %c0_1 = arith.constant 0 : index
    %c0_2 = arith.constant 0 : index
    %c0_3 = arith.constant 0 : index
    %2 = vector.load %arg2[%c0_1, %c0_2, %c0_3] : memref<2x128x384xbf16, #tpu.memory_space<vmem>>, vector<1x128x384xbf16>
    %3 = vector.shape_cast %2 : vector<1x128x384xbf16> to vector<128x384xbf16>
    %cst = arith.constant dense<0.000000e+00> : vector<128x384xf32>
    %4 = tpu.matmul %1, %3, %cst {dimension_numbers = #tpu.dot_dimension_numbers<[1], [0], [0], [1], [0, 0, 1, 1], [], []>} : vector<128x128xbf16>, vector<128x384xbf16>, vector<128x384xf32> -> vector<128x384xf32>
    %c0_4 = arith.constant 0 : index
    %c0_5 = arith.constant 0 : index
    %c0_6 = arith.constant 0 : index
    %5 = vector.load %arg3[%c0_4, %c0_5, %c0_6] : memref<2x1x384xf32, #tpu.memory_space<vmem>>, vector<1x1x384xf32>
    %6 = vector.shape_cast %5 : vector<1x1x384xf32> to vector<1x384xf32>
    %7 = vector.broadcast %6 : vector<1x384xf32> to vector<128x384xf32>
    %8 = arith.addf %4, %7 : vector<128x384xf32>
    %9 = vector.extract_strided_slice %8 {offsets = [0, 0], sizes = [128, 128], strides = [1, 1]} : vector<128x384xf32> to vector<128x128xf32>
    %10 = arith.negf %9 : vector<128x128xf32>
    %11 = math.exp %10 : vector<128x128xf32>
    %cst_7 = arith.constant 1.000000e+00 : f32
    %12 = vector.broadcast %cst_7 : f32 to vector<128x128xf32>
    %13 = arith.addf %12, %11 : vector<128x128xf32>
    %14 = arith.divf %12, %13 : vector<128x128xf32>
    %15 = vector.extract_strided_slice %8 {offsets = [0, 128], sizes = [128, 128], strides = [1, 1]} : vector<128x384xf32> to vector<128x128xf32>
    %16 = math.tanh %15 : vector<128x128xf32>
    %17 = vector.extract_strided_slice %8 {offsets = [0, 256], sizes = [128, 128], strides = [1, 1]} : vector<128x384xf32> to vector<128x128xf32>
    %18 = arith.negf %17 : vector<128x128xf32>
    %19 = math.exp %18 : vector<128x128xf32>
    %cst_8 = arith.constant 1.000000e+00 : f32
    %20 = vector.broadcast %cst_8 : f32 to vector<128x128xf32>
    %21 = arith.addf %20, %19 : vector<128x128xf32>
    %22 = arith.divf %20, %21 : vector<128x128xf32>
    %23 = arith.mulf %14, %16 : vector<128x128xf32>
    %24 = math.tanh %23 : vector<128x128xf32>
    %25 = arith.mulf %22, %24 : vector<128x128xf32>
    %26 = arith.truncf %25 : vector<128x128xf32> to vector<128x128xbf16>
    %c1 = arith.constant 1 : index
    %c0_9 = arith.constant 0 : index
    %c0_10 = arith.constant 0 : index
    %27 = vector.load %arg2[%c1, %c0_9, %c0_10] : memref<2x128x384xbf16, #tpu.memory_space<vmem>>, vector<1x128x384xbf16>
    %28 = vector.shape_cast %27 : vector<1x128x384xbf16> to vector<128x384xbf16>
    %cst_11 = arith.constant dense<0.000000e+00> : vector<128x384xf32>
    %29 = tpu.matmul %26, %28, %cst_11 {dimension_numbers = #tpu.dot_dimension_numbers<[1], [0], [0], [1], [0, 0, 1, 1], [], []>} : vector<128x128xbf16>, vector<128x384xbf16>, vector<128x384xf32> -> vector<128x384xf32>
    %c1_12 = arith.constant 1 : index
    %c0_13 = arith.constant 0 : index
    %c0_14 = arith.constant 0 : index
    %30 = vector.load %arg3[%c1_12, %c0_13, %c0_14] : memref<2x1x384xf32, #tpu.memory_space<vmem>>, vector<1x1x384xf32>
    %31 = vector.shape_cast %30 : vector<1x1x384xf32> to vector<1x384xf32>
    %32 = vector.broadcast %31 : vector<1x384xf32> to vector<128x384xf32>
    %33 = arith.addf %29, %32 : vector<128x384xf32>
    %34 = vector.extract_strided_slice %33 {offsets = [0, 0], sizes = [128, 128], strides = [1, 1]} : vector<128x384xf32> to vector<128x128xf32>
    %35 = arith.negf %34 : vector<128x128xf32>
    %36 = math.exp %35 : vector<128x128xf32>
    %cst_15 = arith.constant 1.000000e+00 : f32
    %37 = vector.broadcast %cst_15 : f32 to vector<128x128xf32>
    %38 = arith.addf %37, %36 : vector<128x128xf32>
    %39 = arith.divf %37, %38 : vector<128x128xf32>
    %40 = vector.extract_strided_slice %33 {offsets = [0, 128], sizes = [128, 128], strides = [1, 1]} : vector<128x384xf32> to vector<128x128xf32>
    %41 = math.tanh %40 : vector<128x128xf32>
    %42 = vector.extract_strided_slice %33 {offsets = [0, 256], sizes = [128, 128], strides = [1, 1]} : vector<128x384xf32> to vector<128x128xf32>
    %43 = arith.negf %42 : vector<128x128xf32>
    %44 = math.exp %43 : vector<128x128xf32>
    %cst_16 = arith.constant 1.000000e+00 : f32
    %45 = vector.broadcast %cst_16 : f32 to vector<128x128xf32>
    %46 = arith.addf %45, %44 : vector<128x128xf32>
    %47 = arith.divf %45, %46 : vector<128x128xf32>
    %48 = arith.mulf %39, %41 : vector<128x128xf32>
    %49 = math.tanh %48 : vector<128x128xf32>
    %50 = arith.mulf %47, %49 : vector<128x128xf32>
    %51 = arith.truncf %50 : vector<128x128xf32> to vector<128x128xbf16>
    %c0_17 = arith.constant 0 : index
    %c0_18 = arith.constant 0 : index
    %52 = vector.load %arg4[%c0_17, %c0_18] : memref<128x128xbf16, #tpu.memory_space<vmem>>, vector<128x128xbf16>
    %cst_19 = arith.constant dense<0.000000e+00> : vector<128x128xf32>
    %53 = tpu.matmul %51, %52, %cst_19 {dimension_numbers = #tpu.dot_dimension_numbers<[1], [0], [0], [1], [0, 0, 1, 1], [], []>} : vector<128x128xbf16>, vector<128x128xbf16>, vector<128x128xf32> -> vector<128x128xf32>
    %c0_20 = arith.constant 0 : index
    %c0_21 = arith.constant 0 : index
    %54 = vector.load %arg5[%c0_20, %c0_21] : memref<1x128xf32, #tpu.memory_space<vmem>>, vector<1x128xf32>
    %55 = vector.broadcast %54 : vector<1x128xf32> to vector<128x128xf32>
    %56 = arith.addf %53, %55 : vector<128x128xf32>
    %c0_22 = arith.constant 0 : index
    %c0_23 = arith.constant 0 : index
    %57 = vector.load %arg6[%c0_22, %c0_23] : memref<128x128xf32, #tpu.memory_space<vmem>>, vector<128x128xf32>
    tpu.vector_store %arg6[%c0_22, %c0_23], %56 {strides = array<i32>} : memref<128x128xf32, #tpu.memory_space<vmem>>, vector<128x128xf32>,
    return
  }
  func.func @transform_0(%arg0: i32) -> (i32, i32) {
    %c0_i32 = arith.constant 0 : i32
    %c0_i32_0 = arith.constant 0 : i32
    return %arg0, %c0_i32 : i32, i32
  }
  func.func @transform_1(%arg0: i32) -> (i32, i32, i32) {
    %c0_i32 = arith.constant 0 : i32
    %c0_i32_0 = arith.constant 0 : i32
    %c0_i32_1 = arith.constant 0 : i32
    %c0_i32_2 = arith.constant 0 : i32
    return %c0_i32, %c0_i32_0, %c0_i32_1 : i32, i32, i32
  }
  func.func @transform_2(%arg0: i32) -> (i32, i32, i32) {
    %c0_i32 = arith.constant 0 : i32
    %c0_i32_0 = arith.constant 0 : i32
    %c0_i32_1 = arith.constant 0 : i32
    %c0_i32_2 = arith.constant 0 : i32
    return %c0_i32, %c0_i32_0, %c0_i32_1 : i32, i32, i32
  }
  func.func @transform_3(%arg0: i32) -> (i32, i32) {
    %c0_i32 = arith.constant 0 : i32
    %c0_i32_0 = arith.constant 0 : i32
    %c0_i32_1 = arith.constant 0 : i32
    return %c0_i32, %c0_i32_0 : i32, i32
  }
  func.func @transform_4(%arg0: i32) -> (i32, i32) {
    %c0_i32 = arith.constant 0 : i32
    %c0_i32_0 = arith.constant 0 : i32
    %c0_i32_1 = arith.constant 0 : i32
    return %c0_i32, %c0_i32_0 : i32, i32
  }
  func.func @transform_5(%arg0: i32) -> (i32, i32) {
    %c0_i32 = arith.constant 0 : i32
    %c0_i32_0 = arith.constant 0 : i32
    return %arg0, %c0_i32 : i32, i32
  }
}

</mosaic_0001>

<llo_original>
// kernel: lstm_forward.1
$region0: #{lstm_forward.1}
  #allocation0 [shape = 'u32[]', space=smem, size = 0x4, offset = 0x4, fixed_abs, tag = 'smem constant byte address 0x4 - core index']
  #allocation1 [shape = 'u32[144,128]{1,0:T(1,128)}', space=vmem, size = 0x12000, scoped, tag = 'internal scratch']
  %s0 = inlined_call_operand.hbm [shape: f32[256,128], index: 0, kind: input, shape index: {}]
  %s1 = inlined_call_operand.hbm [shape: bf16[2,128,384], index: 1, kind: input, shape index: {}]
  %s2 = inlined_call_operand.vmem [shape: f32[2,1,384], index: 2, kind: input, shape index: {}]
  %s3 = inlined_call_operand.hbm [shape: bf16[128,128], index: 3, kind: input, shape index: {}]
  %s4 = inlined_call_operand.vmem [shape: f32[1,128], index: 4, kind: input, shape index: {}]
  %s5 = inlined_call_operand.vmem [shape: f32[256,128], index: 5, kind: output, shape index: {}]
  %s6 = sld [smem:[#allocation0]]
  $region65: #{lstm_forward.1} parent=0
    _
  %s8 = ssub.s32 1, %s6
  %s9 = scalar_select 0, %s8, %s6
  $region1: #{lstm_forward.1} parent=0
    #allocation2 [shape = 'u8[131072]{0}', space=vmem, size = 0x20000, scoped, tag = 'input window, operand 0']
    #allocation3 [shape = 's32[2]{0}', space=sflag, size = 0x8, scoped, tag = 'scoped memory for lstm_forward.1']
    #allocation4 [shape = 'u8[196608]{0}', space=vmem, size = 0x30000, scoped, tag = 'input window, operand 1, single buffered']
    #allocation5 [shape = 's32[1]{0}', space=sflag, size = 0x4, scoped, tag = 'scoped memory for lstm_forward.1']
    #allocation6 [shape = 'u8[32768]{0}', space=vmem, size = 0x8000, scoped, tag = 'input window, operand 3, single buffered']
    %10 = vsyncpa [#allocation3], 0
    %s11 = scalar_lea.sflag [#allocation3], 1
    %12 = vsyncpa %s11, 0
    %13 = vsyncpa [#allocation5], 0
    loop: start=0, step=1, limit=4
    $region2: #{lstm_forward.1} parent=1 // loop_pre_header
      _
    $region3: #{lstm_forward.1} parent=1 // loop_header
      %s15 = sphi 0, %s19
      %p16 = scmp.ge.s32.totalorder %s15, 4
      %s25 = sphi 0, %s27
      %s28 = sphi 0, %s25
      %s29 = sphi 0, %s28
      %s45 = sphi 0, %s29
      %s49 = sphi 0, %s49
      %s51 = sphi 0, %s49
      %s52 = sphi 0, %s51
      %s66 = sphi 0, %s52
      %s70 = sphi 0, %s70
      %s72 = sphi 0, %s70
      %s73 = sphi 0, %s72
      %s87 = sphi 0, %s73
      %s91 = sphi 0, %s91
      %s93 = sphi 0, %s91
      %s94 = sphi 0, %s93
      %s108 = sphi 0, %s94
      %s112 = sphi 0, %s112
      %s114 = sphi 0, %s112
      %s115 = sphi 0, %s114
      %s129 = sphi 0, %s115
      %s135 = sphi 0, %s137
      %s138 = sphi 0, %s135
      %s139 = sphi 0, %s138
      %s155 = sphi 0, %s139
    $region4: #{lstm_forward.1} parent=1 // loop_header_branch
      %18 = sbr.rel (%p16) target = $region8
    $region5: #{lstm_forward.1} parent=1 // loop_body
      %s20 = ssub.s32 %s15, 1
      %s21 = ssub.s32 %s15, 2
      %s22 = sadd.s32 %s15, 1
      %s23 = ssub.s32 %s15, %s22
      %p24 = scmp.eq.s32.totalorder %s23, 0
      %s26 = sadd.s32 %s25, 1
      %s27 = scalar_select %p24, %s25, %s26
      %p30 = pneg %p24
      %p31 = scmp.eq.s32.totalorder %s15, 1
      %p32 = por %p30, %p31
      %p33 = scmp.ne.s32.totalorder %s25, %s28
      %p34 = scmp.eq.s32.totalorder %s15, 0
      %p35 = por %p33, %p34
      %p36 = scmp.ne.s32.totalorder %s25, %s28
      %p37 = scmp.eq.s32.totalorder %s20, 1
      %p38 = por %p36, %p37
      %p39 = scmp.ne.s32.totalorder %s28, %s29
      %p40 = scmp.eq.s32.totalorder %s20, 0
      %p41 = por %p39, %p40
      %p42 = scmp.ne.s32.totalorder %s28, %s29
      %p43 = scmp.eq.s32.totalorder %s21, 1
      %p44 = por %p42, %p43
      %p46 = scmp.ne.s32.totalorder %s29, %s45
      %p47 = scmp.eq.s32.totalorder %s21, 0
      %p48 = por %p46, %p47
      %s50 = sadd.s32 %s49, 1
      %p53 = scmp.eq.s32.totalorder %s15, 1
      %p54 = scmp.ne.s32.totalorder %s49, %s51
      %p55 = scmp.eq.s32.totalorder %s15, 0
      %p56 = por %p54, %p55
      %p57 = scmp.ne.s32.totalorder %s49, %s51
      %p58 = scmp.eq.s32.totalorder %s20, 1
      %p59 = por %p57, %p58
      %p60 = scmp.ne.s32.totalorder %s51, %s52
      %p61 = scmp.eq.s32.totalorder %s20, 0
      %p62 = por %p60, %p61
      %p63 = scmp.ne.s32.totalorder %s51, %s52
      %p64 = scmp.eq.s32.totalorder %s21, 1
      %p65 = por %p63, %p64
      %p67 = scmp.ne.s32.totalorder %s52, %s66
      %p68 = scmp.eq.s32.totalorder %s21, 0
      %p69 = por %p67, %p68
      %s71 = sadd.s32 %s70, 1
      %p74 = scmp.eq.s32.totalorder %s15, 1
      %p75 = scmp.ne.s32.totalorder %s70, %s72
      %p76 = scmp.eq.s32.totalorder %s15, 0
      %p77 = por %p75, %p76
      %p78 = scmp.ne.s32.totalorder %s70, %s72
      %p79 = scmp.eq.s32.totalorder %s20, 1
      %p80 = por %p78, %p79
      %p81 = scmp.ne.s32.totalorder %s72, %s73
      %p82 = scmp.eq.s32.totalorder %s20, 0
      %p83 = por %p81, %p82
      %p84 = scmp.ne.s32.totalorder %s72, %s73
      %p85 = scmp.eq.s32.totalorder %s21, 1
      %p86 = por %p84, %p85
      %p88 = scmp.ne.s32.totalorder %s73, %s87
      %p89 = scmp.eq.s32.totalorder %s21, 0
      %p90 = por %p88, %p89
      %s92 = sadd.s32 %s91, 1
      %p95 = scmp.eq.s32.totalorder %s15, 1
      %p96 = scmp.ne.s32.totalorder %s91, %s93
      %p97 = scmp.eq.s32.totalorder %s15, 0
      %p98 = por %p96, %p97
      %p99 = scmp.ne.s32.totalorder %s91, %s93
      %p100 = scmp.eq.s32.totalorder %s20, 1
      %p101 = por %p99, %p100
      %p102 = scmp.ne.s32.totalorder %s93, %s94
      %p103 = scmp.eq.s32.totalorder %s20, 0
      %p104 = por %p102, %p103
      %p105 = scmp.ne.s32.totalorder %s93, %s94
      %p106 = scmp.eq.s32.totalorder %s21, 1
      %p107 = por %p105, %p106
      %p109 = scmp.ne.s32.totalorder %s94, %s108
      %p110 = scmp.eq.s32.totalorder %s21, 0
      %p111 = por %p109, %p110
      %s113 = sadd.s32 %s112, 1
      %p116 = scmp.eq.s32.totalorder %s15, 1
      %p117 = scmp.ne.s32.totalorder %s112, %s114
      %p118 = scmp.eq.s32.totalorder %s15, 0
      %p119 = por %p117, %p118
      %p120 = scmp.ne.s32.totalorder %s112, %s114
      %p121 = scmp.eq.s32.totalorder %s20, 1
      %p122 = por %p120, %p121
      %p123 = scmp.ne.s32.totalorder %s114, %s115
      %p124 = scmp.eq.s32.totalorder %s20, 0
      %p125 = por %p123, %p124
      %p126 = scmp.ne.s32.totalorder %s114, %s115
      %p127 = scmp.eq.s32.totalorder %s21, 1
      %p128 = por %p126, %p127
      %p130 = scmp.ne.s32.totalorder %s115, %s129
      %p131 = scmp.eq.s32.totalorder %s21, 0
      %p132 = por %p130, %p131
      %s133 = ssub.s32 %s15, %s22
      %p134 = scmp.eq.s32.totalorder %s133, 0
      %s136 = sadd.s32 %s135, 1
      %s137 = scalar_select %p134, %s135, %s136
      %p140 = pneg %p134
      %p141 = scmp.eq.s32.totalorder %s15, 1
      %p142 = por %p140, %p141
      %p143 = scmp.ne.s32.totalorder %s135, %s138
      %p144 = scmp.eq.s32.totalorder %s15, 0
      %p145 = por %p143, %p144
      %p146 = scmp.ne.s32.totalorder %s135, %s138
      %p147 = scmp.eq.s32.totalorder %s20, 1
      %p148 = por %p146, %p147
      %p149 = scmp.ne.s32.totalorder %s138, %s139
      %p150 = scmp.eq.s32.totalorder %s20, 0
      %p151 = por %p149, %p150
      %p152 = scmp.ne.s32.totalorder %s138, %s139
      %p153 = scmp.eq.s32.totalorder %s21, 1
      %p154 = por %p152, %p153
      %p156 = scmp.ne.s32.totalorder %s139, %s155
      %p157 = scmp.eq.s32.totalorder %s21, 0
      %p158 = por %p156, %p157
      %p159 = scmp.le.s32.totalorder 1, %s15
      %p160 = scmp.lt.s32.totalorder %s15, 3
      %p161 = pnand %p159, %p160
      %p162 = pneg %p161
      // Predicated region
      $region9: #{lstm_forward.1} parent=5 // pred_check
        _
      $region10: #{lstm_forward.1} parent=5 // pred_check_branch
        %164 = sbr.rel (%p161) target = $region12
      $region11: #{lstm_forward.1} parent=5 // pred_region
        %s165 = ssub.s32 %s15, 1
        // Predicated region
        $region13: #{lstm_forward.1} parent=11 // pred_check
          %p166 = pneg %p62
        $region14: #{lstm_forward.1} parent=11 // pred_check_branch
          %168 = sbr.rel (%p166) target = $region16
        $region15: #{lstm_forward.1} parent=11 // pred_region
          %s170 = ssub.s32 6144, 6144
          %171 = vsyncadd [#allocation5], %s170
          %s172 = sshll.u32 [#allocation4], 4
          %s173 = int_to_ptr.vmem [resolvable:$true] %s172
          %178 = dma.hbm_to_vmem [thread:$0]  %s1, 6144, %s173, [#allocation5], 192, 192, 12
        $region16: #{lstm_forward.1} parent=11 // pred_fallthru
          _
        // Predicated region
        $region17: #{lstm_forward.1} parent=11 // pred_check
          %p179 = pneg %p83
        $region18: #{lstm_forward.1} parent=11 // pred_check_branch
          %181 = sbr.rel (%p179) target = $region20
        $region19: #{lstm_forward.1} parent=11 // pred_region
          _
        $region20: #{lstm_forward.1} parent=11 // pred_fallthru
          _
        // Predicated region
        $region21: #{lstm_forward.1} parent=11 // pred_check
          %p182 = pneg %p104
        $region22: #{lstm_forward.1} parent=11 // pred_check_branch
          %184 = sbr.rel (%p182) target = $region24
        $region23: #{lstm_forward.1} parent=11 // pred_region
          %s186 = ssub.s32 1024, 1024
          %187 = vsyncadd [#allocation5], %s186
          %s188 = sshll.u32 [#allocation6], 4
          %s189 = int_to_ptr.vmem [resolvable:$true] %s188
          %194 = dma.hbm_to_vmem [thread:$0]  %s3, 1024, %s189, [#allocation5], 64, 64, 4
        $region24: #{lstm_forward.1} parent=11 // pred_fallthru
          _
        // Predicated region
        $region25: #{lstm_forward.1} parent=11 // pred_check
          %p195 = pneg %p125
        $region26: #{lstm_forward.1} parent=11 // pred_check_branch
          %197 = sbr.rel (%p195) target = $region28
        $region27: #{lstm_forward.1} parent=11 // pred_region
          _
        $region28: #{lstm_forward.1} parent=11 // pred_fallthru
          _
      $region12: #{lstm_forward.1} parent=5 // pred_fallthru
        _
      %p198 = scmp.lt.s32.totalorder %s15, 2
      // Predicated region
      $region29: #{lstm_forward.1} parent=5 // pred_check
        %p199 = pneg %p198
      $region30: #{lstm_forward.1} parent=5 // pred_check_branch
        %201 = sbr.rel (%p199) target = $region32
      $region31: #{lstm_forward.1} parent=5 // pred_region
        // Predicated region
        $region33: #{lstm_forward.1} parent=31 // pred_check
          %p202 = pneg %p35
        $region34: #{lstm_forward.1} parent=31 // pred_check_branch
          %204 = sbr.rel (%p202) target = $region36
        $region35: #{lstm_forward.1} parent=31 // pred_region
          %s205 = sand.u32 %s25, 1
          %s206 = scalar_lea.sflag [#allocation3], %s205
          %s207 = sand.u32 %s25, 1
          %s208 = smul.addr %s207, 128
          %s209 = scalar_lea.vmem [#allocation2], %s208
          %s210 = smul.u32 16, %s15
          %s212 = ssub.s32 2048, 2048
          %213 = vsyncadd %s206, %s212
          %s214 = smul.addr %s210, 128
          %s215 = scalar_lea.hbm %s0, %s214
          %s216 = sshll.u32 %s209, 4
          %s217 = int_to_ptr.vmem [resolvable:$true] %s216
          %222 = dma.hbm_to_vmem [thread:$0]  %s215, 2048, %s217, %s206, 128, 128, 8
        $region36: #{lstm_forward.1} parent=31 // pred_fallthru
          _
      $region32: #{lstm_forward.1} parent=5 // pred_fallthru
        _
      %p223 = scmp.le.s32.totalorder 1, %s15
      %p224 = scmp.lt.s32.totalorder %s15, 3
      %p225 = pnand %p223, %p224
      %p226 = pneg %p225
      // Predicated region
      $region37: #{lstm_forward.1} parent=5 // pred_check
        _
      $region38: #{lstm_forward.1} parent=5 // pred_check_branch
        %228 = sbr.rel (%p225) target = $region40
      $region39: #{lstm_forward.1} parent=5 // pred_region
        %s229 = ssub.s32 %s15, 1
        %s230 = sand.u32 %s28, 1
        %s231 = scalar_lea.sflag [#allocation3], %s230
        %s232 = sand.u32 %s28, 1
        %s233 = smul.addr %s232, 128
        %s234 = scalar_lea.vmem [#allocation2], %s233
        // Predicated region
        $region41: #{lstm_forward.1} parent=39 // pred_check
          %p235 = pneg %p41
        $region42: #{lstm_forward.1} parent=39 // pred_check_branch
          %237 = sbr.rel (%p235) target = $region44
        $region43: #{lstm_forward.1} parent=39 // pred_region
          %238 = dma.done %s231, 2048
        $region44: #{lstm_forward.1} parent=39 // pred_fallthru
          _
        // Predicated region
        $region45: #{lstm_forward.1} parent=39 // pred_check
          %p239 = pneg %p62
        $region46: #{lstm_forward.1} parent=39 // pred_check_branch
          %241 = sbr.rel (%p239) target = $region48
        $region47: #{lstm_forward.1} parent=39 // pred_region
          %242 = dma.done [#allocation5], 6144
        $region48: #{lstm_forward.1} parent=39 // pred_fallthru
          _
        // Predicated region
        $region49: #{lstm_forward.1} parent=39 // pred_check
          %p243 = pneg %p104
        $region50: #{lstm_forward.1} parent=39 // pred_check_branch
          %245 = sbr.rel (%p243) target = $region52
        $region51: #{lstm_forward.1} parent=39 // pred_region
          %246 = dma.done [#allocation5], 1024
        $region52: #{lstm_forward.1} parent=39 // pred_fallthru
          _
        %s247 = sand.u32 %s28, 1
        %s248 = scalar_lea.sflag [#allocation3], %s247
        %s249 = sand.u32 %s28, 1
        %s250 = smul.addr %s249, 128
        %s251 = scalar_lea.vmem [#allocation2], %s250
        %p252 = pneg %p41
        %p253 = pneg %p38
        %p254 = pneg %p62
        %p255 = pneg %p59
        %p256 = pneg %p83
        %p257 = pneg %p80
        %p258 = pneg %p104
        %p259 = pneg %p101
        %p260 = pneg %p125
        %p261 = pneg %p122
        %p262 = pneg %p151
        %p263 = pneg %p148
        %s264 = smul.u32 16, %s20
        %p265 = scmp.lt.s32.totalorder %s264, 31
        %s266 = scalar_select %p265, %s264, 31
        %s267 = smul.addr %s266, 8
        %s268 = scalar_lea.vmem %s5, %s267
        %s269 = smul.u32 16, %s20
        %s270 = smul.u32 16, %s20
        %p271 = scmp.lt.s32.totalorder %s270, 31
        %s272 = scalar_select %p271, %s270, 31
        %s273 = smul.addr %s272, 8
        %s274 = scalar_lea.vmem %s5, %s273
        %s275 = smul.u32 16, %s20
        %v277 = vld [vmem:[%s234] sm:$0xff]
        %v278 = vld [vmem:[%s234 + $0x8] sm:$0xff]
        %v279 = vld [vmem:[%s234 + $0x10] sm:$0xff]
        %v280 = vld [vmem:[%s234 + $0x18] sm:$0xff]
        %v281 = vld [vmem:[%s234 + $0x20] sm:$0xff]
        %v282 = vld [vmem:[%s234 + $0x28] sm:$0xff]
        %v283 = vld [vmem:[%s234 + $0x30] sm:$0xff]
        %v284 = vld [vmem:[%s234 + $0x38] sm:$0xff]
        %v285 = vld [vmem:[%s234 + $0x40] sm:$0xff]
        %v286 = vld [vmem:[%s234 + $0x48] sm:$0xff]
        %v287 = vld [vmem:[%s234 + $0x50] sm:$0xff]
        %v288 = vld [vmem:[%s234 + $0x58] sm:$0xff]
        %v289 = vld [vmem:[%s234 + $0x60] sm:$0xff]
        %v290 = vld [vmem:[%s234 + $0x68] sm:$0xff]
        %v291 = vld [vmem:[%s234 + $0x70] sm:$0xff]
        %v292 = vld [vmem:[%s234 + $0x78] sm:$0xff]
        %v293 = vpack.c.bf16 %v278, %v277
        %v294 = vpack.c.bf16 %v280, %v279
        %v295 = vpack.c.bf16 %v282, %v281
        %v296 = vpack.c.bf16 %v284, %v283
        %v297 = vpack.c.bf16 %v286, %v285
        %v298 = vpack.c.bf16 %v288, %v287
        %v299 = vpack.c.bf16 %v290, %v289
        %v300 = vpack.c.bf16 %v292, %v291
        %v301 = vld [vmem:[#allocation4] sm:$0xff]
        %v302 = vld [vmem:[#allocation4 + $0x8] sm:$0xf]
        %v303 = vld [vmem:[#allocation4 + $0xc] sm:$0xff]
        %v304 = vld [vmem:[#allocation4 + $0x14] sm:$0xf]
        %v305 = vld [vmem:[#allocation4 + $0x18] sm:$0xff]
        %v306 = vld [vmem:[#allocation4 + $0x20] sm:$0xf]
        %v307 = vld [vmem:[#allocation4 + $0x24] sm:$0xff]
        %v308 = vld [vmem:[#allocation4 + $0x2c] sm:$0xf]
        %v309 = vld [vmem:[#allocation4 + $0x30] sm:$0xff]
        %v310 = vld [vmem:[#allocation4 + $0x38] sm:$0xf]
        %v311 = vld [vmem:[#allocation4 + $0x3c] sm:$0xff]
        %v312 = vld [vmem:[#allocation4 + $0x44] sm:$0xf]
        %v313 = vld [vmem:[#allocation4 + $0x48] sm:$0xff]
        %v314 = vld [vmem:[#allocation4 + $0x50] sm:$0xf]
        %v315 = vld [vmem:[#allocation4 + $0x54] sm:$0xff]
        %v316 = vld [vmem:[#allocation4 + $0x5c] sm:$0xf]
        %v317 = vld [vmem:[#allocation4 + $0x60] sm:$0xff]
        %v318 = vld [vmem:[#allocation4 + $0x68] sm:$0xf]
        %v319 = vld [vmem:[#allocation4 + $0x6c] sm:$0xff]
        %v320 = vld [vmem:[#allocation4 + $0x74] sm:$0xf]
        %v321 = vld [vmem:[#allocation4 + $0x78] sm:$0xff]
        %v322 = vld [vmem:[#allocation4 + $0x80] sm:$0xf]
        %v323 = vld [vmem:[#allocation4 + $0x84] sm:$0xff]
        %v324 = vld [vmem:[#allocation4 + $0x8c] sm:$0xf]
        %v325 = vld [vmem:[#allocation4 + $0x90] sm:$0xff]
        %v326 = vld [vmem:[#allocation4 + $0x98] sm:$0xf]
        %v327 = vld [vmem:[#allocation4 + $0x9c] sm:$0xff]
        %v328 = vld [vmem:[#allocation4 + $0xa4] sm:$0xf]
        %v329 = vld [vmem:[#allocation4 + $0xa8] sm:$0xff]
        %v330 = vld [vmem:[#allocation4 + $0xb0] sm:$0xf]
        %v331 = vld [vmem:[#allocation4 + $0xb4] sm:$0xff]
        %v332 = vld [vmem:[#allocation4 + $0xbc] sm:$0xf]
        %v333 = vld [vmem:[%s2] sm:$0x7]
        %v335 = vlaneseq
        %v336 = vshrl.u32 %v335, 7
        %v337 = vsub.s32 0, %v336
        %v338 = vrot.slane %v333, %v337
        %v339 = vlaneseq
        %v340 = vshrl.u32 %v339, 7
        %v341 = vsub.s32 1, %v340
        %v342 = vrot.slane %v333, %v341
        %v343 = vlaneseq
        %v344 = vshrl.u32 %v343, 7
        %v345 = vsub.s32 2, %v344
        %v346 = vrot.slane %v333, %v345
        %v382 = vunpack.c.l.b16 %v301
        %v383 = vunpack.c.h.b16 %v301
        %v384 = vunpack.c.l.b16 %v302
        %v385 = vunpack.c.l.b16 %v303
        %v386 = vunpack.c.h.b16 %v303
        %v387 = vunpack.c.l.b16 %v304
        %v388 = vunpack.c.l.b16 %v305
        %v389 = vunpack.c.h.b16 %v305
        %v390 = vunpack.c.l.b16 %v306
        %v391 = vunpack.c.l.b16 %v307
        %v392 = vunpack.c.h.b16 %v307
        %v393 = vunpack.c.l.b16 %v308
        %v394 = vunpack.c.l.b16 %v309
        %v395 = vunpack.c.h.b16 %v309
        %v396 = vunpack.c.l.b16 %v310
        %v397 = vunpack.c.l.b16 %v311
        %v398 = vunpack.c.h.b16 %v311
        %v399 = vunpack.c.l.b16 %v312
        %v400 = vunpack.c.l.b16 %v313
        %v401 = vunpack.c.h.b16 %v313
        %v402 = vunpack.c.l.b16 %v314
        %v403 = vunpack.c.l.b16 %v315
        %v404 = vunpack.c.h.b16 %v315
        %v405 = vunpack.c.l.b16 %v316
        %v406 = vunpack.c.l.b16 %v317
        %v407 = vunpack.c.h.b16 %v317
        %v408 = vunpack.c.l.b16 %v318
        %v409 = vunpack.c.l.b16 %v319
        %v410 = vunpack.c.h.b16 %v319
        %v411 = vunpack.c.l.b16 %v320
        %v412 = vunpack.c.l.b16 %v321
        %v413 = vunpack.c.h.b16 %v321
        %v414 = vunpack.c.l.b16 %v322
        %v415 = vunpack.c.l.b16 %v323
        %v416 = vunpack.c.h.b16 %v323
        %v417 = vunpack.c.l.b16 %v324
        %v418 = vunpack.c.l.b16 %v325
        %v419 = vunpack.c.h.b16 %v325
        %v420 = vunpack.c.l.b16 %v326
        %v421 = vunpack.c.l.b16 %v327
        %v422 = vunpack.c.h.b16 %v327
        %v423 = vunpack.c.l.b16 %v328
        %v424 = vunpack.c.l.b16 %v329
        %v425 = vunpack.c.h.b16 %v329
        %v426 = vunpack.c.l.b16 %v330
        %v427 = vunpack.c.l.b16 %v331
        %v428 = vunpack.c.h.b16 %v331
        %v429 = vunpack.c.l.b16 %v332
        %v430 = vpack.c.b16 %v385, %v382
        %v431 = vpack.c.b16 %v386, %v383
        %v432 = vpack.c.b16 %v387, %v384
        %v433 = vpack.c.b16 %v391, %v388
        %v434 = vpack.c.b16 %v392, %v389
        %v435 = vpack.c.b16 %v393, %v390
        %v436 = vpack.c.b16 %v397, %v394
        %v437 = vpack.c.b16 %v398, %v395
        %v438 = vpack.c.b16 %v399, %v396
        %v439 = vpack.c.b16 %v403, %v400
        %v440 = vpack.c.b16 %v404, %v401
        %v441 = vpack.c.b16 %v405, %v402
        %v442 = vpack.c.b16 %v409, %v406
        %v443 = vpack.c.b16 %v410, %v407
        %v444 = vpack.c.b16 %v411, %v408
        %v445 = vpack.c.b16 %v415, %v412
        %v446 = vpack.c.b16 %v416, %v413
        %v447 = vpack.c.b16 %v417, %v414
        %v448 = vpack.c.b16 %v421, %v418
        %v449 = vpack.c.b16 %v422, %v419
        %v450 = vpack.c.b16 %v423, %v420
        %v451 = vpack.c.b16 %v427, %v424
        %v452 = vpack.c.b16 %v428, %v425
        %v453 = vpack.c.b16 %v429, %v426
        %478 = vmatprep.subr.bf16.mxu0 %v431
        %479 = vmatpush1.bf16.msra.mxu0 %v430
        %480 = vmatprep.subr.bf16.mxu0 %v434
        %481 = vmatpush1.bf16.msra.mxu0 %v433
        %482 = vmatprep.subr.bf16.mxu0 %v437
        %483 = vmatpush1.bf16.msra.mxu0 %v436
        %484 = vmatprep.subr.bf16.mxu0 %v440
        %485 = vmatpush1.bf16.msra.mxu0 %v439
        %486 = vmatprep.subr.bf16.mxu0 %v443
        %487 = vmatpush1.bf16.msra.mxu0 %v442
        %488 = vmatprep.subr.bf16.mxu0 %v446
        %489 = vmatpush1.bf16.msra.mxu0 %v445
        %490 = vmatprep.subr.bf16.mxu0 %v449
        %491 = vmatpush1.bf16.msra.mxu0 %v448
        %492 = vmatprep.subr.bf16.mxu0 %v452
        %493 = vmatpush1.bf16.msra.mxu0 %v451
        %494 = vmatprep.subr.bf16.mxu0 0
        %495 = vmatpush1.bf16.msra.mxu0 0
        %496 = vmatprep.subr.bf16.mxu0 0
        %497 = vmatpush1.bf16.msra.mxu0 0
        %498 = vmatprep.subr.bf16.mxu0 0
        %499 = vmatpush1.bf16.msra.mxu0 0
        %500 = vmatprep.subr.bf16.mxu0 0
        %501 = vmatpush1.bf16.msra.mxu0 0
        %502 = vmatprep.subr.bf16.mxu0 0
        %503 = vmatpush1.bf16.msra.mxu0 0
        %504 = vmatprep.subr.bf16.mxu0 0
        %505 = vmatpush1.bf16.msra.mxu0 0
        %506 = vmatprep.subr.bf16.mxu0 0
        %507 = vmatpush1.bf16.msra.mxu0 0
        %508 = vmatprep.subr.bf16.mxu0 0
        %509 = vmatpush1.bf16.msra.mxu0 0
        %510 = vmatprep.mubr.bf16.mxu0 0
        %511 = vmatmul.mubr.bf16.gmra.mrb[0].mxu0 %v293
        %v512 = vpop.f32.mrb[0].mxu0
        %v513 = vadd.f32 %v338, %v512
        %v514 = vpop.f32.mrb[0].mxu0
        %v515 = vadd.f32 %v342, %v514
        %v516 = vpop.f32.mrb[0].mxu0
        %v517 = vadd.f32 %v338, %v516
        %v518 = vpop.f32.mrb[0].mxu0
        %v519 = vadd.f32 %v342, %v518
        %520 = vmatprep.mubr.bf16.mxu0 0
        %521 = vmatmul.mubr.bf16.gmra.mrb[0].mxu0 %v294
        %v522 = vpop.f32.mrb[0].mxu0
        %v523 = vadd.f32 %v338, %v522
        %v524 = vpop.f32.mrb[0].mxu0
        %v525 = vadd.f32 %v342, %v524
        %v526 = vpop.f32.mrb[0].mxu0
        %v527 = vadd.f32 %v338, %v526
        %v528 = vpop.f32.mrb[0].mxu0
        %v529 = vadd.f32 %v342, %v528
        %530 = vmatprep.mubr.bf16.mxu0 0
        %531 = vmatmul.mubr.bf16.gmra.mrb[0].mxu0 %v295
        %v532 = vpop.f32.mrb[0].mxu0
        %v533 = vadd.f32 %v338, %v532
        %v534 = vpop.f32.mrb[0].mxu0
        %v535 = vadd.f32 %v342, %v534
        %v536 = vpop.f32.mrb[0].mxu0
        %v537 = vadd.f32 %v338, %v536
        %v538 = vpop.f32.mrb[0].mxu0
        %v539 = vadd.f32 %v342, %v538
        %540 = vmatprep.mubr.bf16.mxu0 0
        %541 = vmatmul.mubr.bf16.gmra.mrb[0].mxu0 %v296
        %v542 = vpop.f32.mrb[0].mxu0
        %v543 = vadd.f32 %v338, %v542
        %v544 = vpop.f32.mrb[0].mxu0
        %v545 = vadd.f32 %v342, %v544
        %v546 = vpop.f32.mrb[0].mxu0
        %v547 = vadd.f32 %v338, %v546
        %v548 = vpop.f32.mrb[0].mxu0
        %v549 = vadd.f32 %v342, %v548
        %550 = vmatprep.mubr.bf16.mxu0 0
        %551 = vmatmul.mubr.bf16.gmra.mrb[0].mxu0 %v297
        %v552 = vpop.f32.mrb[0].mxu0
        %v553 = vadd.f32 %v338, %v552
        %v554 = vpop.f32.mrb[0].mxu0
        %v555 = vadd.f32 %v342, %v554
        %v556 = vpop.f32.mrb[0].mxu0
        %v557 = vadd.f32 %v338, %v556
        %v558 = vpop.f32.mrb[0].mxu0
        %v559 = vadd.f32 %v342, %v558
        %560 = vmatprep.mubr.bf16.mxu0 0
        %561 = vmatmul.mubr.bf16.gmra.mrb[0].mxu0 %v298
        %v562 = vpop.f32.mrb[0].mxu0
        %v563 = vadd.f32 %v338, %v562
        %v564 = vpop.f32.mrb[0].mxu0
        %v565 = vadd.f32 %v342, %v564
        %v566 = vpop.f32.mrb[0].mxu0
        %v567 = vadd.f32 %v338, %v566
        %v568 = vpop.f32.mrb[0].mxu0
        %v569 = vadd.f32 %v342, %v568
        %570 = vmatprep.mubr.bf16.mxu0 0
        %571 = vmatmul.mubr.bf16.gmra.mrb[0].mxu0 %v299
        %v572 = vpop.f32.mrb[0].mxu0
        %v573 = vadd.f32 %v338, %v572
        %v574 = vpop.f32.mrb[0].mxu0
        %v575 = vadd.f32 %v342, %v574
        %v576 = vpop.f32.mrb[0].mxu0
        %v577 = vadd.f32 %v338, %v576
        %v578 = vpop.f32.mrb[0].mxu0
        %v579 = vadd.f32 %v342, %v578
        %580 = vmatprep.mubr.bf16.mxu0 0
        %581 = vmatmul.mubr.bf16.gmra.mrb[0].mxu0 %v300
        %v582 = vpop.f32.mrb[0].mxu0
        %v583 = vadd.f32 %v338, %v582
        %v584 = vpop.f32.mrb[0].mxu0
        %v585 = vadd.f32 %v342, %v584
        %v586 = vpop.f32.mrb[0].mxu0
        %v587 = vadd.f32 %v338, %v586
        %v588 = vpop.f32.mrb[0].mxu0
        %v589 = vadd.f32 %v342, %v588
        %590 = vdwg.mxu0
        %591 = vmatprep.subr.bf16.mxu0 0
        %592 = vmatpush1.bf16.msra.mxu0 %v432
        %593 = vmatprep.subr.bf16.mxu0 0
        %594 = vmatpush1.bf16.msra.mxu0 %v435
        %595 = vmatprep.subr.bf16.mxu0 0
        %596 = vmatpush1.bf16.msra.mxu0 %v438
        %597 = vmatprep.subr.bf16.mxu0 0
        %598 = vmatpush1.bf16.msra.mxu0 %v441
        %599 = vmatprep.subr.bf16.mxu0 0
        %600 = vmatpush1.bf16.msra.mxu0 %v444
        %601 = vmatprep.subr.bf16.mxu0 0
        %602 = vmatpush1.bf16.msra.mxu0 %v447
        %603 = vmatprep.subr.bf16.mxu0 0
        %604 = vmatpush1.bf16.msra.mxu0 %v450
        %605 = vmatprep.subr.bf16.mxu0 0
        %606 = vmatpush1.bf16.msra.mxu0 %v453
        %607 = vmatprep.subr.bf16.mxu0 0
        %608 = vmatpush1.bf16.msra.mxu0 0
        %609 = vmatprep.subr.bf16.mxu0 0
        %610 = vmatpush1.bf16.msra.mxu0 0
        %611 = vmatprep.subr.bf16.mxu0 0
        %612 = vmatpush1.bf16.msra.mxu0 0
        %613 = vmatprep.subr.bf16.mxu0 0
        %614 = vmatpush1.bf16.msra.mxu0 0
        %615 = vmatprep.subr.bf16.mxu0 0
        %616 = vmatpush1.bf16.msra.mxu0 0
        %617 = vmatprep.subr.bf16.mxu0 0
        %618 = vmatpush1.bf16.msra.mxu0 0
        %619 = vmatprep.subr.bf16.mxu0 0
        %620 = vmatpush1.bf16.msra.mxu0 0
        %621 = vmatprep.subr.bf16.mxu0 0
        %622 = vmatpush1.bf16.msra.mxu0 0
        %623 = vmatprep.mubr.bf16.mxu0 0
        %624 = vmatmul.mubr.bf16.gmra.mrb[0].mxu0 %v293
        %v625 = vpop.f32.mrb[0].mxu0
        %v626 = vadd.f32 %v346, %v625
        %v627 = vpop.f32.mrb[0].mxu0
        %v628 = vpop.f32.mrb[0].mxu0
        %v629 = vadd.f32 %v346, %v628
        %v630 = vpop.f32.mrb[0].mxu0
        %631 = vmatprep.mubr.bf16.mxu0 0
        %632 = vmatmul.mubr.bf16.gmra.mrb[0].mxu0 %v294
        %v633 = vpop.f32.mrb[0].mxu0
        %v634 = vadd.f32 %v346, %v633
        %v635 = vpop.f32.mrb[0].mxu0
        %v636 = vpop.f32.mrb[0].mxu0
        %v637 = vadd.f32 %v346, %v636
        %v638 = vpop.f32.mrb[0].mxu0
        %639 = vmatprep.mubr.bf16.mxu0 0
        %640 = vmatmul.mubr.bf16.gmra.mrb[0].mxu0 %v295
        %v641 = vpop.f32.mrb[0].mxu0
        %v642 = vadd.f32 %v346, %v641
        %v643 = vpop.f32.mrb[0].mxu0
        %v644 = vpop.f32.mrb[0].mxu0
        %v645 = vadd.f32 %v346, %v644
        %v646 = vpop.f32.mrb[0].mxu0
        %647 = vmatprep.mubr.bf16.mxu0 0
        %648 = vmatmul.mubr.bf16.gmra.mrb[0].mxu0 %v296
        %v649 = vpop.f32.mrb[0].mxu0
        %v650 = vadd.f32 %v346, %v649
        %v651 = vpop.f32.mrb[0].mxu0
        %v652 = vpop.f32.mrb[0].mxu0
        %v653 = vadd.f32 %v346, %v652
        %v654 = vpop.f32.mrb[0].mxu0
        %655 = vmatprep.mubr.bf16.mxu0 0
        %656 = vmatmul.mubr.bf16.gmra.mrb[0].mxu0 %v297
        %v657 = vpop.f32.mrb[0].mxu0
        %v658 = vadd.f32 %v346, %v657
        %v659 = vpop.f32.mrb[0].mxu0
        %v660 = vpop.f32.mrb[0].mxu0
        %v661 = vadd.f32 %v346, %v660
        %v662 = vpop.f32.mrb[0].mxu0
        %663 = vmatprep.mubr.bf16.mxu0 0
        %664 = vmatmul.mubr.bf16.gmra.mrb[0].mxu0 %v298
        %v665 = vpop.f32.mrb[0].mxu0
        %v666 = vadd.f32 %v346, %v665
        %v667 = vpop.f32.mrb[0].mxu0
        %v668 = vpop.f32.mrb[0].mxu0
        %v669 = vadd.f32 %v346, %v668
        %v670 = vpop.f32.mrb[0].mxu0
        %671 = vmatprep.mubr.bf16.mxu0 0
        %672 = vmatmul.mubr.bf16.gmra.mrb[0].mxu0 %v299
        %v673 = vpop.f32.mrb[0].mxu0
        %v674 = vadd.f32 %v346, %v673
        %v675 = vpop.f32.mrb[0].mxu0
        %v676 = vpop.f32.mrb[0].mxu0
        %v677 = vadd.f32 %v346, %v676
        %v678 = vpop.f32.mrb[0].mxu0
        %679 = vmatprep.mubr.bf16.mxu0 0
        %680 = vmatmul.mubr.bf16.gmra.mrb[0].mxu0 %v300
        %v681 = vpop.f32.mrb[0].mxu0
        %v682 = vadd.f32 %v346, %v681
        %v683 = vpop.f32.mrb[0].mxu0
        %v684 = vpop.f32.mrb[0].mxu0
        %v685 = vadd.f32 %v346, %v684
        %v686 = vpop.f32.mrb[0].mxu0
        %687 = vdwg.mxu0
        %v688 = vxor.u32 %v513, 2147483648
        %v689 = vxor.u32 %v517, 2147483648
        %v690 = vxor.u32 %v523, 2147483648
        %v691 = vxor.u32 %v527, 2147483648
        %v692 = vxor.u32 %v533, 2147483648
        %v693 = vxor.u32 %v537, 2147483648
        %v694 = vxor.u32 %v543, 2147483648
        %v695 = vxor.u32 %v547, 2147483648
        %v696 = vxor.u32 %v553, 2147483648
        %v697 = vxor.u32 %v557, 2147483648
        %v698 = vxor.u32 %v563, 2147483648
        %v699 = vxor.u32 %v567, 2147483648
        %v700 = vxor.u32 %v573, 2147483648
        %v701 = vxor.u32 %v577, 2147483648
        %v702 = vxor.u32 %v583, 2147483648
        %v703 = vxor.u32 %v587, 2147483648
        %v704 = vmul.f32 %v688, 1.442695
        %v705 = vpow.pop %v704
        %v706 = vmul.f32 %v689, 1.442695
        %v707 = vpow.pop %v706
        %v708 = vmul.f32 %v690, 1.442695
        %v709 = vpow.pop %v708
        %v710 = vmul.f32 %v691, 1.442695
        %v711 = vpow.pop %v710
        %v712 = vmul.f32 %v692, 1.442695
        %v713 = vpow.pop %v712
        %v714 = vmul.f32 %v693, 1.442695
        %v715 = vpow.pop %v714
        %v716 = vmul.f32 %v694, 1.442695
        %v717 = vpow.pop %v716
        %v718 = vmul.f32 %v695, 1.442695
        %v719 = vpow.pop %v718
        %v720 = vmul.f32 %v696, 1.442695
        %v721 = vpow.pop %v720
        %v722 = vmul.f32 %v697, 1.442695
        %v723 = vpow.pop %v722
        %v724 = vmul.f32 %v698, 1.442695
        %v725 = vpow.pop %v724
        %v726 = vmul.f32 %v699, 1.442695
        %v727 = vpow.pop %v726
        %v728 = vmul.f32 %v700, 1.442695
        %v729 = vpow.pop %v728
        %v730 = vmul.f32 %v701, 1.442695
        %v731 = vpow.pop %v730
        %v732 = vmul.f32 %v702, 1.442695
        %v733 = vpow.pop %v732
        %v734 = vmul.f32 %v703, 1.442695
        %v735 = vpow.pop %v734
        %v736 = vadd.f32 %v705, 1.0
        %v737 = vadd.f32 %v707, 1.0
        %v738 = vadd.f32 %v709, 1.0
        %v739 = vadd.f32 %v711, 1.0
        %v740 = vadd.f32 %v713, 1.0
        %v741 = vadd.f32 %v715, 1.0
        %v742 = vadd.f32 %v717, 1.0
        %v743 = vadd.f32 %v719, 1.0
        %v744 = vadd.f32 %v721, 1.0
        %v745 = vadd.f32 %v723, 1.0
        %v746 = vadd.f32 %v725, 1.0
        %v747 = vadd.f32 %v727, 1.0
        %v748 = vadd.f32 %v729, 1.0
        %v749 = vadd.f32 %v731, 1.0
        %v750 = vadd.f32 %v733, 1.0
        %v751 = vadd.f32 %v735, 1.0
        %v752 = vrcp.pop %v736
        %v753 = vmul.f32 1.0, %v752
        %v754 = vrcp.pop %v737
        %v755 = vmul.f32 1.0, %v754
        %v756 = vrcp.pop %v738
        %v757 = vmul.f32 1.0, %v756
        %v758 = vrcp.pop %v739
        %v759 = vmul.f32 1.0, %v758
        %v760 = vrcp.pop %v740
        %v761 = vmul.f32 1.0, %v760
        %v762 = vrcp.pop %v741
        %v763 = vmul.f32 1.0, %v762
        %v764 = vrcp.pop %v742
        %v765 = vmul.f32 1.0, %v764
        %v766 = vrcp.pop %v743
        %v767 = vmul.f32 1.0, %v766
        %v768 = vrcp.pop %v744
        %v769 = vmul.f32 1.0, %v768
        %v770 = vrcp.pop %v745
        %v771 = vmul.f32 1.0, %v770
        %v772 = vrcp.pop %v746
        %v773 = vmul.f32 1.0, %v772
        %v774 = vrcp.pop %v747
        %v775 = vmul.f32 1.0, %v774
        %v776 = vrcp.pop %v748
        %v777 = vmul.f32 1.0, %v776
        %v778 = vrcp.pop %v749
        %v779 = vmul.f32 1.0, %v778
        %v780 = vrcp.pop %v750
        %v781 = vmul.f32 1.0, %v780
        %v782 = vrcp.pop %v751
        %v783 = vmul.f32 1.0, %v782
        %v784 = vtanh.pop %v515
        %v785 = vtanh.pop %v519
        %v786 = vtanh.pop %v525
        %v787 = vtanh.pop %v529
        %v788 = vtanh.pop %v535
        %v789 = vtanh.pop %v539
        %v790 = vtanh.pop %v545
        %v791 = vtanh.pop %v549
        %v792 = vtanh.pop %v555
        %v793 = vtanh.pop %v559
        %v794 = vtanh.pop %v565
        %v795 = vtanh.pop %v569
        %v796 = vtanh.pop %v575
        %v797 = vtanh.pop %v579
        %v798 = vtanh.pop %v585
        %v799 = vtanh.pop %v589
        %v800 = vxor.u32 %v626, 2147483648
        %v801 = vxor.u32 %v629, 2147483648
        %v802 = vxor.u32 %v634, 2147483648
        %v803 = vxor.u32 %v637, 2147483648
        %v804 = vxor.u32 %v642, 2147483648
        %v805 = vxor.u32 %v645, 2147483648
        %v806 = vxor.u32 %v650, 2147483648
        %v807 = vxor.u32 %v653, 2147483648
        %v808 = vxor.u32 %v658, 2147483648
        %v809 = vxor.u32 %v661, 2147483648
        %v810 = vxor.u32 %v666, 2147483648
        %v811 = vxor.u32 %v669, 2147483648
        %v812 = vxor.u32 %v674, 2147483648
        %v813 = vxor.u32 %v677, 2147483648
        %v814 = vxor.u32 %v682, 2147483648
        %v815 = vxor.u32 %v685, 2147483648
        %v816 = vmul.f32 %v800, 1.442695
        %v817 = vpow.pop %v816
        %v818 = vmul.f32 %v801, 1.442695
        %v819 = vpow.pop %v818
        %v820 = vmul.f32 %v802, 1.442695
        %v821 = vpow.pop %v820
        %v822 = vmul.f32 %v803, 1.442695
        %v823 = vpow.pop %v822
        %v824 = vmul.f32 %v804, 1.442695
        %v825 = vpow.pop %v824
        %v826 = vmul.f32 %v805, 1.442695
        %v827 = vpow.pop %v826
        %v828 = vmul.f32 %v806, 1.442695
        %v829 = vpow.pop %v828
        %v830 = vmul.f32 %v807, 1.442695
        %v831 = vpow.pop %v830
        %v832 = vmul.f32 %v808, 1.442695
        %v833 = vpow.pop %v832
        %v834 = vmul.f32 %v809, 1.442695
        %v835 = vpow.pop %v834
        %v836 = vmul.f32 %v810, 1.442695
        %v837 = vpow.pop %v836
        %v838 = vmul.f32 %v811, 1.442695
        %v839 = vpow.pop %v838
        %v840 = vmul.f32 %v812, 1.442695
        %v841 = vpow.pop %v840
        %v842 = vmul.f32 %v813, 1.442695
        %v843 = vpow.pop %v842
        %v844 = vmul.f32 %v814, 1.442695
        %v845 = vpow.pop %v844
        %v846 = vmul.f32 %v815, 1.442695
        %v847 = vpow.pop %v846
        %v848 = vadd.f32 %v817, 1.0
        %v849 = vadd.f32 %v819, 1.0
        %v850 = vadd.f32 %v821, 1.0
        %v851 = vadd.f32 %v823, 1.0
        %v852 = vadd.f32 %v825, 1.0
        %v853 = vadd.f32 %v827, 1.0
        %v854 = vadd.f32 %v829, 1.0
        %v855 = vadd.f32 %v831, 1.0
        %v856 = vadd.f32 %v833, 1.0
        %v857 = vadd.f32 %v835, 1.0
        %v858 = vadd.f32 %v837, 1.0
        %v859 = vadd.f32 %v839, 1.0
        %v860 = vadd.f32 %v841, 1.0
        %v861 = vadd.f32 %v843, 1.0
        %v862 = vadd.f32 %v845, 1.0
        %v863 = vadd.f32 %v847, 1.0
        %v864 = vrcp.pop %v848
        %v865 = vmul.f32 1.0, %v864
        %v866 = vrcp.pop %v849
        %v867 = vmul.f32 1.0, %v866
        %v868 = vrcp.pop %v850
        %v869 = vmul.f32 1.0, %v868
        %v870 = vrcp.pop %v851
        %v871 = vmul.f32 1.0, %v870
        %v872 = vrcp.pop %v852
        %v873 = vmul.f32 1.0, %v872
        %v874 = vrcp.pop %v853
        %v875 = vmul.f32 1.0, %v874
        %v876 = vrcp.pop %v854
        %v877 = vmul.f32 1.0, %v876
        %v878 = vrcp.pop %v855
        %v879 = vmul.f32 1.0, %v878
        %v880 = vrcp.pop %v856
        %v881 = vmul.f32 1.0, %v880
        %v882 = vrcp.pop %v857
        %v883 = vmul.f32 1.0, %v882
        %v884 = vrcp.pop %v858
        %v885 = vmul.f32 1.0, %v884
        %v886 = vrcp.pop %v859
        %v887 = vmul.f32 1.0, %v886
        %v888 = vrcp.pop %v860
        %v889 = vmul.f32 1.0, %v888
        %v890 = vrcp.pop %v861
        %v891 = vmul.f32 1.0, %v890
        %v892 = vrcp.pop %v862
        %v893 = vmul.f32 1.0, %v892
        %v894 = vrcp.pop %v863
        %v895 = vmul.f32 1.0, %v894
        %v896 = vmul.f32 %v753, %v784
        %v897 = vmul.f32 %v755, %v785
        %v898 = vmul.f32 %v757, %v786
        %v899 = vmul.f32 %v759, %v787
        %v900 = vmul.f32 %v761, %v788
        %v901 = vmul.f32 %v763, %v789
        %v902 = vmul.f32 %v765, %v790
        %v903 = vmul.f32 %v767, %v791
        %v904 = vmul.f32 %v769, %v792
        %v905 = vmul.f32 %v771, %v793
        %v906 = vmul.f32 %v773, %v794
        %v907 = vmul.f32 %v775, %v795
        %v908 = vmul.f32 %v777, %v796
        %v909 = vmul.f32 %v779, %v797
        %v910 = vmul.f32 %v781, %v798
        %v911 = vmul.f32 %v783, %v799
        %v912 = vtanh.pop %v896
        %v913 = vtanh.pop %v897
        %v914 = vtanh.pop %v898
        %v915 = vtanh.pop %v899
        %v916 = vtanh.pop %v900
        %v917 = vtanh.pop %v901
        %v918 = vtanh.pop %v902
        %v919 = vtanh.pop %v903
        %v920 = vtanh.pop %v904
        %v921 = vtanh.pop %v905
        %v922 = vtanh.pop %v906
        %v923 = vtanh.pop %v907
        %v924 = vtanh.pop %v908
        %v925 = vtanh.pop %v909
        %v926 = vtanh.pop %v910
        %v927 = vtanh.pop %v911
        %v928 = vmul.f32 %v865, %v912
        %v929 = vmul.f32 %v867, %v913
        %v930 = vmul.f32 %v869, %v914
        %v931 = vmul.f32 %v871, %v915
        %v932 = vmul.f32 %v873, %v916
        %v933 = vmul.f32 %v875, %v917
        %v934 = vmul.f32 %v877, %v918
        %v935 = vmul.f32 %v879, %v919
        %v936 = vmul.f32 %v881, %v920
        %v937 = vmul.f32 %v883, %v921
        %v938 = vmul.f32 %v885, %v922
        %v939 = vmul.f32 %v887, %v923
        %v940 = vmul.f32 %v889, %v924
        %v941 = vmul.f32 %v891, %v925
        %v942 = vmul.f32 %v893, %v926
        %v943 = vmul.f32 %v895, %v927
        %v944 = vpack.c.bf16 %v929, %v928
        %v945 = vpack.c.bf16 %v931, %v930
        %v946 = vpack.c.bf16 %v933, %v932
        %v947 = vpack.c.bf16 %v935, %v934
        %v948 = vpack.c.bf16 %v937, %v936
        %v949 = vpack.c.bf16 %v939, %v938
        %v950 = vpack.c.bf16 %v941, %v940
        %v951 = vpack.c.bf16 %v943, %v942
        %s952 = scalar_lea.vmem [#allocation4], 192
        %v953 = vld [vmem:[%s952] sm:$0xff]
        %v954 = vld [vmem:[%s952 + $0x8] sm:$0xf]
        %v955 = vld [vmem:[%s952 + $0xc] sm:$0xff]
        %v956 = vld [vmem:[%s952 + $0x14] sm:$0xf]
        %v957 = vld [vmem:[%s952 + $0x18] sm:$0xff]
        %v958 = vld [vmem:[%s952 + $0x20] sm:$0xf]
        %v959 = vld [vmem:[%s952 + $0x24] sm:$0xff]
        %v960 = vld [vmem:[%s952 + $0x2c] sm:$0xf]
        %v961 = vld [vmem:[%s952 + $0x30] sm:$0xff]
        %v962 = vld [vmem:[%s952 + $0x38] sm:$0xf]
        %v963 = vld [vmem:[%s952 + $0x3c] sm:$0xff]
        %v964 = vld [vmem:[%s952 + $0x44] sm:$0xf]
        %v965 = vld [vmem:[%s952 + $0x48] sm:$0xff]
        %v966 = vld [vmem:[%s952 + $0x50] sm:$0xf]
        %v967 = vld [vmem:[%s952 + $0x54] sm:$0xff]
        %v968 = vld [vmem:[%s952 + $0x5c] sm:$0xf]
        %v969 = vld [vmem:[%s952 + $0x60] sm:$0xff]
        %v970 = vld [vmem:[%s952 + $0x68] sm:$0xf]
        %v971 = vld [vmem:[%s952 + $0x6c] sm:$0xff]
        %v972 = vld [vmem:[%s952 + $0x74] sm:$0xf]
        %v973 = vld [vmem:[%s952 + $0x78] sm:$0xff]
        %v974 = vld [vmem:[%s952 + $0x80] sm:$0xf]
        %v975 = vld [vmem:[%s952 + $0x84] sm:$0xff]
        %v976 = vld [vmem:[%s952 + $0x8c] sm:$0xf]
        %v977 = vld [vmem:[%s952 + $0x90] sm:$0xff]
        %v978 = vld [vmem:[%s952 + $0x98] sm:$0xf]
        %v979 = vld [vmem:[%s952 + $0x9c] sm:$0xff]
        %v980 = vld [vmem:[%s952 + $0xa4] sm:$0xf]
        %v981 = vld [vmem:[%s952 + $0xa8] sm:$0xff]
        %v982 = vld [vmem:[%s952 + $0xb0] sm:$0xf]
        %v983 = vld [vmem:[%s952 + $0xb4] sm:$0xff]
        %v984 = vld [vmem:[%s952 + $0xbc] sm:$0xf]
        %s985 = scalar_lea.vmem %s2, 3
        %v986 = vld [vmem:[%s985] sm:$0x7]
        %v988 = vlaneseq
        %v989 = vshrl.u32 %v988, 7
        %v990 = vsub.s32 0, %v989
        %v991 = vrot.slane %v986, %v990
        %v992 = vlaneseq
        %v993 = vshrl.u32 %v992, 7
        %v994 = vsub.s32 1, %v993
        %v995 = vrot.slane %v986, %v994
        %v996 = vlaneseq
        %v997 = vshrl.u32 %v996, 7
        %v998 = vsub.s32 2, %v997
        %v999 = vrot.slane %v986, %v998
        %v1035 = vunpack.c.l.b16 %v953
        %v1036 = vunpack.c.h.b16 %v953
        %v1037 = vunpack.c.l.b16 %v954
        %v1038 = vunpack.c.l.b16 %v955
        %v1039 = vunpack.c.h.b16 %v955
        %v1040 = vunpack.c.l.b16 %v956
        %v1041 = vunpack.c.l.b16 %v957
        %v1042 = vunpack.c.h.b16 %v957
        %v1043 = vunpack.c.l.b16 %v958
        %v1044 = vunpack.c.l.b16 %v959
        %v1045 = vunpack.c.h.b16 %v959
        %v1046 = vunpack.c.l.b16 %v960
        %v1047 = vunpack.c.l.b16 %v961
        %v1048 = vunpack.c.h.b16 %v961
        %v1049 = vunpack.c.l.b16 %v962
        %v1050 = vunpack.c.l.b16 %v963
        %v1051 = vunpack.c.h.b16 %v963
        %v1052 = vunpack.c.l.b16 %v964
        %v1053 = vunpack.c.l.b16 %v965
        %v1054 = vunpack.c.h.b16 %v965
        %v1055 = vunpack.c.l.b16 %v966
        %v1056 = vunpack.c.l.b16 %v967
        %v1057 = vunpack.c.h.b16 %v967
        %v1058 = vunpack.c.l.b16 %v968
        %v1059 = vunpack.c.l.b16 %v969
        %v1060 = vunpack.c.h.b16 %v969
        %v1061 = vunpack.c.l.b16 %v970
        %v1062 = vunpack.c.l.b16 %v971
        %v1063 = vunpack.c.h.b16 %v971
        %v1064 = vunpack.c.l.b16 %v972
        %v1065 = vunpack.c.l.b16 %v973
        %v1066 = vunpack.c.h.b16 %v973
        %v1067 = vunpack.c.l.b16 %v974
        %v1068 = vunpack.c.l.b16 %v975
        %v1069 = vunpack.c.h.b16 %v975
        %v1070 = vunpack.c.l.b16 %v976
        %v1071 = vunpack.c.l.b16 %v977
        %v1072 = vunpack.c.h.b16 %v977
        %v1073 = vunpack.c.l.b16 %v978
        %v1074 = vunpack.c.l.b16 %v979
        %v1075 = vunpack.c.h.b16 %v979
        %v1076 = vunpack.c.l.b16 %v980
        %v1077 = vunpack.c.l.b16 %v981
        %v1078 = vunpack.c.h.b16 %v981
        %v1079 = vunpack.c.l.b16 %v982
        %v1080 = vunpack.c.l.b16 %v983
        %v1081 = vunpack.c.h.b16 %v983
        %v1082 = vunpack.c.l.b16 %v984
        %v1083 = vpack.c.b16 %v1038, %v1035
        %v1084 = vpack.c.b16 %v1039, %v1036
        %v1085 = vpack.c.b16 %v1040, %v1037
        %v1086 = vpack.c.b16 %v1044, %v1041
        %v1087 = vpack.c.b16 %v1045, %v1042
        %v1088 = vpack.c.b16 %v1046, %v1043
        %v1089 = vpack.c.b16 %v1050, %v1047
        %v1090 = vpack.c.b16 %v1051, %v1048
        %v1091 = vpack.c.b16 %v1052, %v1049
        %v1092 = vpack.c.b16 %v1056, %v1053
        %v1093 = vpack.c.b16 %v1057, %v1054
        %v1094 = vpack.c.b16 %v1058, %v1055
        %v1095 = vpack.c.b16 %v1062, %v1059
        %v1096 = vpack.c.b16 %v1063, %v1060
        %v1097 = vpack.c.b16 %v1064, %v1061
        %v1098 = vpack.c.b16 %v1068, %v1065
        %v1099 = vpack.c.b16 %v1069, %v1066
        %v1100 = vpack.c.b16 %v1070, %v1067
        %v1101 = vpack.c.b16 %v1074, %v1071
        %v1102 = vpack.c.b16 %v1075, %v1072
        %v1103 = vpack.c.b16 %v1076, %v1073
        %v1104 = vpack.c.b16 %v1080, %v1077
        %v1105 = vpack.c.b16 %v1081, %v1078
        %v1106 = vpack.c.b16 %v1082, %v1079
        %1131 = vmatprep.subr.bf16.mxu0 %v1084
        %1132 = vmatpush1.bf16.msra.mxu0 %v1083
        %1133 = vmatprep.subr.bf16.mxu0 %v1087
        %1134 = vmatpush1.bf16.msra.mxu0 %v1086
        %1135 = vmatprep.subr.bf16.mxu0 %v1090
        %1136 = vmatpush1.bf16.msra.mxu0 %v1089
        %1137 = vmatprep.subr.bf16.mxu0 %v1093
        %1138 = vmatpush1.bf16.msra.mxu0 %v1092
        %1139 = vmatprep.subr.bf16.mxu0 %v1096
        %1140 = vmatpush1.bf16.msra.mxu0 %v1095
        %1141 = vmatprep.subr.bf16.mxu0 %v1099
        %1142 = vmatpush1.bf16.msra.mxu0 %v1098
        %1143 = vmatprep.subr.bf16.mxu0 %v1102
        %1144 = vmatpush1.bf16.msra.mxu0 %v1101
        %1145 = vmatprep.subr.bf16.mxu0 %v1105
        %1146 = vmatpush1.bf16.msra.mxu0 %v1104
        %1147 = vmatprep.subr.bf16.mxu0 0
        %1148 = vmatpush1.bf16.msra.mxu0 0
        %1149 = vmatprep.subr.bf16.mxu0 0
        %1150 = vmatpush1.bf16.msra.mxu0 0
        %1151 = vmatprep.subr.bf16.mxu0 0
        %1152 = vmatpush1.bf16.msra.mxu0 0
        %1153 = vmatprep.subr.bf16.mxu0 0
        %1154 = vmatpush1.bf16.msra.mxu0 0
        %1155 = vmatprep.subr.bf16.mxu0 0
        %1156 = vmatpush1.bf16.msra.mxu0 0
        %1157 = vmatprep.subr.bf16.mxu0 0
        %1158 = vmatpush1.bf16.msra.mxu0 0
        %1159 = vmatprep.subr.bf16.mxu0 0
        %1160 = vmatpush1.bf16.msra.mxu0 0
        %1161 = vmatprep.subr.bf16.mxu0 0
        %1162 = vmatpush1.bf16.msra.mxu0 0
        %1163 = vmatprep.mubr.bf16.mxu0 0
        %1164 = vmatmul.mubr.bf16.gmra.mrb[0].mxu0 %v944
        %v1165 = vpop.f32.mrb[0].mxu0
        %v1166 = vadd.f32 %v991, %v1165
        %v1167 = vpop.f32.mrb[0].mxu0
        %v1168 = vadd.f32 %v995, %v1167
        %v1169 = vpop.f32.mrb[0].mxu0
        %v1170 = vadd.f32 %v991, %v1169
        %v1171 = vpop.f32.mrb[0].mxu0
        %v1172 = vadd.f32 %v995, %v1171
        %1173 = vmatprep.mubr.bf16.mxu0 0
        %1174 = vmatmul.mubr.bf16.gmra.mrb[0].mxu0 %v945
        %v1175 = vpop.f32.mrb[0].mxu0
        %v1176 = vadd.f32 %v991, %v1175
        %v1177 = vpop.f32.mrb[0].mxu0
        %v1178 = vadd.f32 %v995, %v1177
        %v1179 = vpop.f32.mrb[0].mxu0
        %v1180 = vadd.f32 %v991, %v1179
        %v1181 = vpop.f32.mrb[0].mxu0
        %v1182 = vadd.f32 %v995, %v1181
        %1183 = vmatprep.mubr.bf16.mxu0 0
        %1184 = vmatmul.mubr.bf16.gmra.mrb[0].mxu0 %v946
        %v1185 = vpop.f32.mrb[0].mxu0
        %v1186 = vadd.f32 %v991, %v1185
        %v1187 = vpop.f32.mrb[0].mxu0
        %v1188 = vadd.f32 %v995, %v1187
        %v1189 = vpop.f32.mrb[0].mxu0
        %v1190 = vadd.f32 %v991, %v1189
        %v1191 = vpop.f32.mrb[0].mxu0
        %v1192 = vadd.f32 %v995, %v1191
        %1193 = vmatprep.mubr.bf16.mxu0 0
        %1194 = vmatmul.mubr.bf16.gmra.mrb[0].mxu0 %v947
        %v1195 = vpop.f32.mrb[0].mxu0
        %v1196 = vadd.f32 %v991, %v1195
        %v1197 = vpop.f32.mrb[0].mxu0
        %v1198 = vadd.f32 %v995, %v1197
        %v1199 = vpop.f32.mrb[0].mxu0
        %v1200 = vadd.f32 %v991, %v1199
        %v1201 = vpop.f32.mrb[0].mxu0
        %v1202 = vadd.f32 %v995, %v1201
        %1203 = vmatprep.mubr.bf16.mxu0 0
        %1204 = vmatmul.mubr.bf16.gmra.mrb[0].mxu0 %v948
        %v1205 = vpop.f32.mrb[0].mxu0
        %v1206 = vadd.f32 %v991, %v1205
        %v1207 = vpop.f32.mrb[0].mxu0
        %v1208 = vadd.f32 %v995, %v1207
        %v1209 = vpop.f32.mrb[0].mxu0
        %v1210 = vadd.f32 %v991, %v1209
        %v1211 = vpop.f32.mrb[0].mxu0
        %v1212 = vadd.f32 %v995, %v1211
        %1213 = vmatprep.mubr.bf16.mxu0 0
        %1214 = vmatmul.mubr.bf16.gmra.mrb[0].mxu0 %v949
        %v1215 = vpop.f32.mrb[0].mxu0
        %v1216 = vadd.f32 %v991, %v1215
        %v1217 = vpop.f32.mrb[0].mxu0
        %v1218 = vadd.f32 %v995, %v1217
        %v1219 = vpop.f32.mrb[0].mxu0
        %v1220 = vadd.f32 %v991, %v1219
        %v1221 = vpop.f32.mrb[0].mxu0
        %v1222 = vadd.f32 %v995, %v1221
        %1223 = vmatprep.mubr.bf16.mxu0 0
        %1224 = vmatmul.mubr.bf16.gmra.mrb[0].mxu0 %v950
        %v1225 = vpop.f32.mrb[0].mxu0
        %v1226 = vadd.f32 %v991, %v1225
        %v1227 = vpop.f32.mrb[0].mxu0
        %v1228 = vadd.f32 %v995, %v1227
        %v1229 = vpop.f32.mrb[0].mxu0
        %v1230 = vadd.f32 %v991, %v1229
        %v1231 = vpop.f32.mrb[0].mxu0
        %v1232 = vadd.f32 %v995, %v1231
        %1233 = vmatprep.mubr.bf16.mxu0 0
        %1234 = vmatmul.mubr.bf16.gmra.mrb[0].mxu0 %v951
        %v1235 = vpop.f32.mrb[0].mxu0
        %v1236 = vadd.f32 %v991, %v1235
        %v1237 = vpop.f32.mrb[0].mxu0
        %v1238 = vadd.f32 %v995, %v1237
        %v1239 = vpop.f32.mrb[0].mxu0
        %v1240 = vadd.f32 %v991, %v1239
        %v1241 = vpop.f32.mrb[0].mxu0
        %v1242 = vadd.f32 %v995, %v1241
        %1243 = vdwg.mxu0
        %1244 = vmatprep.subr.bf16.mxu0 0
        %1245 = vmatpush1.bf16.msra.mxu0 %v1085
        %1246 = vmatprep.subr.bf16.mxu0 0
        %1247 = vmatpush1.bf16.msra.mxu0 %v1088
        %1248 = vmatprep.subr.bf16.mxu0 0
        %1249 = vmatpush1.bf16.msra.mxu0 %v1091
        %1250 = vmatprep.subr.bf16.mxu0 0
        %1251 = vmatpush1.bf16.msra.mxu0 %v1094
        %1252 = vmatprep.subr.bf16.mxu0 0
        %1253 = vmatpush1.bf16.msra.mxu0 %v1097
        %1254 = vmatprep.subr.bf16.mxu0 0
        %1255 = vmatpush1.bf16.msra.mxu0 %v1100
        %1256 = vmatprep.subr.bf16.mxu0 0
        %1257 = vmatpush1.bf16.msra.mxu0 %v1103
        %1258 = vmatprep.subr.bf16.mxu0 0
        %1259 = vmatpush1.bf16.msra.mxu0 %v1106
        %1260 = vmatprep.subr.bf16.mxu0 0
        %1261 = vmatpush1.bf16.msra.mxu0 0
        %1262 = vmatprep.subr.bf16.mxu0 0
        %1263 = vmatpush1.bf16.msra.mxu0 0
        %1264 = vmatprep.subr.bf16.mxu0 0
        %1265 = vmatpush1.bf16.msra.mxu0 0
        %1266 = vmatprep.subr.bf16.mxu0 0
        %1267 = vmatpush1.bf16.msra.mxu0 0
        %1268 = vmatprep.subr.bf16.mxu0 0
        %1269 = vmatpush1.bf16.msra.mxu0 0
        %1270 = vmatprep.subr.bf16.mxu0 0
        %1271 = vmatpush1.bf16.msra.mxu0 0
        %1272 = vmatprep.subr.bf16.mxu0 0
        %1273 = vmatpush1.bf16.msra.mxu0 0
        %1274 = vmatprep.subr.bf16.mxu0 0
        %1275 = vmatpush1.bf16.msra.mxu0 0
        %1276 = vmatprep.mubr.bf16.mxu0 0
        %1277 = vmatmul.mubr.bf16.gmra.mrb[0].mxu0 %v944
        %v1278 = vpop.f32.mrb[0].mxu0
        %v1279 = vadd.f32 %v999, %v1278
        %v1280 = vpop.f32.mrb[0].mxu0
        %v1281 = vpop.f32.mrb[0].mxu0
        %v1282 = vadd.f32 %v999, %v1281
        %v1283 = vpop.f32.mrb[0].mxu0
        %1284 = vmatprep.mubr.bf16.mxu0 0
        %1285 = vmatmul.mubr.bf16.gmra.mrb[0].mxu0 %v945
        %v1286 = vpop.f32.mrb[0].mxu0
        %v1287 = vadd.f32 %v999, %v1286
        %v1288 = vpop.f32.mrb[0].mxu0
        %v1289 = vpop.f32.mrb[0].mxu0
        %v1290 = vadd.f32 %v999, %v1289
        %v1291 = vpop.f32.mrb[0].mxu0
        %1292 = vmatprep.mubr.bf16.mxu0 0
        %1293 = vmatmul.mubr.bf16.gmra.mrb[0].mxu0 %v946
        %v1294 = vpop.f32.mrb[0].mxu0
        %v1295 = vadd.f32 %v999, %v1294
        %v1296 = vpop.f32.mrb[0].mxu0
        %v1297 = vpop.f32.mrb[0].mxu0
        %v1298 = vadd.f32 %v999, %v1297
        %v1299 = vpop.f32.mrb[0].mxu0
        %1300 = vmatprep.mubr.bf16.mxu0 0
        %1301 = vmatmul.mubr.bf16.gmra.mrb[0].mxu0 %v947
        %v1302 = vpop.f32.mrb[0].mxu0
        %v1303 = vadd.f32 %v999, %v1302
        %v1304 = vpop.f32.mrb[0].mxu0
        %v1305 = vpop.f32.mrb[0].mxu0
        %v1306 = vadd.f32 %v999, %v1305
        %v1307 = vpop.f32.mrb[0].mxu0
        %1308 = vmatprep.mubr.bf16.mxu0 0
        %1309 = vmatmul.mubr.bf16.gmra.mrb[0].mxu0 %v948
        %v1310 = vpop.f32.mrb[0].mxu0
        %v1311 = vadd.f32 %v999, %v1310
        %v1312 = vpop.f32.mrb[0].mxu0
        %v1313 = vpop.f32.mrb[0].mxu0
        %v1314 = vadd.f32 %v999, %v1313
        %v1315 = vpop.f32.mrb[0].mxu0
        %1316 = vmatprep.mubr.bf16.mxu0 0
        %1317 = vmatmul.mubr.bf16.gmra.mrb[0].mxu0 %v949
        %v1318 = vpop.f32.mrb[0].mxu0
        %v1319 = vadd.f32 %v999, %v1318
        %v1320 = vpop.f32.mrb[0].mxu0
        %v1321 = vpop.f32.mrb[0].mxu0
        %v1322 = vadd.f32 %v999, %v1321
        %v1323 = vpop.f32.mrb[0].mxu0
        %1324 = vmatprep.mubr.bf16.mxu0 0
        %1325 = vmatmul.mubr.bf16.gmra.mrb[0].mxu0 %v950
        %v1326 = vpop.f32.mrb[0].mxu0
        %v1327 = vadd.f32 %v999, %v1326
        %v1328 = vpop.f32.mrb[0].mxu0
        %v1329 = vpop.f32.mrb[0].mxu0
        %v1330 = vadd.f32 %v999, %v1329
        %v1331 = vpop.f32.mrb[0].mxu0
        %1332 = vmatprep.mubr.bf16.mxu0 0
        %1333 = vmatmul.mubr.bf16.gmra.mrb[0].mxu0 %v951
        %v1334 = vpop.f32.mrb[0].mxu0
        %v1335 = vadd.f32 %v999, %v1334
        %v1336 = vpop.f32.mrb[0].mxu0
        %v1337 = vpop.f32.mrb[0].mxu0
        %v1338 = vadd.f32 %v999, %v1337
        %v1339 = vpop.f32.mrb[0].mxu0
        %1340 = vdwg.mxu0
        %v1341 = vxor.u32 %v1166, 2147483648
        %v1342 = vxor.u32 %v1170, 2147483648
        %v1343 = vxor.u32 %v1176, 2147483648
        %v1344 = vxor.u32 %v1180, 2147483648
        %v1345 = vxor.u32 %v1186, 2147483648
        %v1346 = vxor.u32 %v1190, 2147483648
        %v1347 = vxor.u32 %v1196, 2147483648
        %v1348 = vxor.u32 %v1200, 2147483648
        %v1349 = vxor.u32 %v1206, 2147483648
        %v1350 = vxor.u32 %v1210, 2147483648
        %v1351 = vxor.u32 %v1216, 2147483648
        %v1352 = vxor.u32 %v1220, 2147483648
        %v1353 = vxor.u32 %v1226, 2147483648
        %v1354 = vxor.u32 %v1230, 2147483648
        %v1355 = vxor.u32 %v1236, 2147483648
        %v1356 = vxor.u32 %v1240, 2147483648
        %v1357 = vmul.f32 %v1341, 1.442695
        %v1358 = vpow.pop %v1357
        %v1359 = vmul.f32 %v1342, 1.442695
        %v1360 = vpow.pop %v1359
        %v1361 = vmul.f32 %v1343, 1.442695
        %v1362 = vpow.pop %v1361
        %v1363 = vmul.f32 %v1344, 1.442695
        %v1364 = vpow.pop %v1363
        %v1365 = vmul.f32 %v1345, 1.442695
        %v1366 = vpow.pop %v1365
        %v1367 = vmul.f32 %v1346, 1.442695
        %v1368 = vpow.pop %v1367
        %v1369 = vmul.f32 %v1347, 1.442695
        %v1370 = vpow.pop %v1369
        %v1371 = vmul.f32 %v1348, 1.442695
        %v1372 = vpow.pop %v1371
        %v1373 = vmul.f32 %v1349, 1.442695
        %v1374 = vpow.pop %v1373
        %v1375 = vmul.f32 %v1350, 1.442695
        %v1376 = vpow.pop %v1375
        %v1377 = vmul.f32 %v1351, 1.442695
        %v1378 = vpow.pop %v1377
        %v1379 = vmul.f32 %v1352, 1.442695
        %v1380 = vpow.pop %v1379
        %v1381 = vmul.f32 %v1353, 1.442695
        %v1382 = vpow.pop %v1381
        %v1383 = vmul.f32 %v1354, 1.442695
        %v1384 = vpow.pop %v1383
        %v1385 = vmul.f32 %v1355, 1.442695
        %v1386 = vpow.pop %v1385
        %v1387 = vmul.f32 %v1356, 1.442695
        %v1388 = vpow.pop %v1387
        %v1389 = vadd.f32 %v1358, 1.0
        %v1390 = vadd.f32 %v1360, 1.0
        %v1391 = vadd.f32 %v1362, 1.0
        %v1392 = vadd.f32 %v1364, 1.0
        %v1393 = vadd.f32 %v1366, 1.0
        %v1394 = vadd.f32 %v1368, 1.0
        %v1395 = vadd.f32 %v1370, 1.0
        %v1396 = vadd.f32 %v1372, 1.0
        %v1397 = vadd.f32 %v1374, 1.0
        %v1398 = vadd.f32 %v1376, 1.0
        %v1399 = vadd.f32 %v1378, 1.0
        %v1400 = vadd.f32 %v1380, 1.0
        %v1401 = vadd.f32 %v1382, 1.0
        %v1402 = vadd.f32 %v1384, 1.0
        %v1403 = vadd.f32 %v1386, 1.0
        %v1404 = vadd.f32 %v1388, 1.0
        %v1405 = vrcp.pop %v1389
        %v1406 = vmul.f32 1.0, %v1405
        %v1407 = vrcp.pop %v1390
        %v1408 = vmul.f32 1.0, %v1407
        %v1409 = vrcp.pop %v1391
        %v1410 = vmul.f32 1.0, %v1409
        %v1411 = vrcp.pop %v1392
        %v1412 = vmul.f32 1.0, %v1411
        %v1413 = vrcp.pop %v1393
        %v1414 = vmul.f32 1.0, %v1413
        %v1415 = vrcp.pop %v1394
        %v1416 = vmul.f32 1.0, %v1415
        %v1417 = vrcp.pop %v1395
        %v1418 = vmul.f32 1.0, %v1417
        %v1419 = vrcp.pop %v1396
        %v1420 = vmul.f32 1.0, %v1419
        %v1421 = vrcp.pop %v1397
        %v1422 = vmul.f32 1.0, %v1421
        %v1423 = vrcp.pop %v1398
        %v1424 = vmul.f32 1.0, %v1423
        %v1425 = vrcp.pop %v1399
        %v1426 = vmul.f32 1.0, %v1425
        %v1427 = vrcp.pop %v1400
        %v1428 = vmul.f32 1.0, %v1427
        %v1429 = vrcp.pop %v1401
        %v1430 = vmul.f32 1.0, %v1429
        %v1431 = vrcp.pop %v1402
        %v1432 = vmul.f32 1.0, %v1431
        %v1433 = vrcp.pop %v1403
        %v1434 = vmul.f32 1.0, %v1433
        %v1435 = vrcp.pop %v1404
        %v1436 = vmul.f32 1.0, %v1435
        %v1437 = vtanh.pop %v1168
        %v1438 = vtanh.pop %v1172
        %v1439 = vtanh.pop %v1178
        %v1440 = vtanh.pop %v1182
        %v1441 = vtanh.pop %v1188
        %v1442 = vtanh.pop %v1192
        %v1443 = vtanh.pop %v1198
        %v1444 = vtanh.pop %v1202
        %v1445 = vtanh.pop %v1208
        %v1446 = vtanh.pop %v1212
        %v1447 = vtanh.pop %v1218
        %v1448 = vtanh.pop %v1222
        %v1449 = vtanh.pop %v1228
        %v1450 = vtanh.pop %v1232
        %v1451 = vtanh.pop %v1238
        %v1452 = vtanh.pop %v1242
        %v1453 = vxor.u32 %v1279, 2147483648
        %v1454 = vxor.u32 %v1282, 2147483648
        %v1455 = vxor.u32 %v1287, 2147483648
        %v1456 = vxor.u32 %v1290, 2147483648
        %v1457 = vxor.u32 %v1295, 2147483648
        %v1458 = vxor.u32 %v1298, 2147483648
        %v1459 = vxor.u32 %v1303, 2147483648
        %v1460 = vxor.u32 %v1306, 2147483648
        %v1461 = vxor.u32 %v1311, 2147483648
        %v1462 = vxor.u32 %v1314, 2147483648
        %v1463 = vxor.u32 %v1319, 2147483648
        %v1464 = vxor.u32 %v1322, 2147483648
        %v1465 = vxor.u32 %v1327, 2147483648
        %v1466 = vxor.u32 %v1330, 2147483648
        %v1467 = vxor.u32 %v1335, 2147483648
        %v1468 = vxor.u32 %v1338, 2147483648
        %v1469 = vmul.f32 %v1453, 1.442695
        %v1470 = vpow.pop %v1469
        %v1471 = vmul.f32 %v1454, 1.442695
        %v1472 = vpow.pop %v1471
        %v1473 = vmul.f32 %v1455, 1.442695
        %v1474 = vpow.pop %v1473
        %v1475 = vmul.f32 %v1456, 1.442695
        %v1476 = vpow.pop %v1475
        %v1477 = vmul.f32 %v1457, 1.442695
        %v1478 = vpow.pop %v1477
        %v1479 = vmul.f32 %v1458, 1.442695
        %v1480 = vpow.pop %v1479
        %v1481 = vmul.f32 %v1459, 1.442695
        %v1482 = vpow.pop %v1481
        %v1483 = vmul.f32 %v1460, 1.442695
        %v1484 = vpow.pop %v1483
        %v1485 = vmul.f32 %v1461, 1.442695
        %v1486 = vpow.pop %v1485
        %v1487 = vmul.f32 %v1462, 1.442695
        %v1488 = vpow.pop %v1487
        %v1489 = vmul.f32 %v1463, 1.442695
        %v1490 = vpow.pop %v1489
        %v1491 = vmul.f32 %v1464, 1.442695
        %v1492 = vpow.pop %v1491
        %v1493 = vmul.f32 %v1465, 1.442695
        %v1494 = vpow.pop %v1493
        %v1495 = vmul.f32 %v1466, 1.442695
        %v1496 = vpow.pop %v1495
        %v1497 = vmul.f32 %v1467, 1.442695
        %v1498 = vpow.pop %v1497
        %v1499 = vmul.f32 %v1468, 1.442695
        %v1500 = vpow.pop %v1499
        %v1501 = vadd.f32 %v1470, 1.0
        %v1502 = vadd.f32 %v1472, 1.0
        %v1503 = vadd.f32 %v1474, 1.0
        %v1504 = vadd.f32 %v1476, 1.0
        %v1505 = vadd.f32 %v1478, 1.0
        %v1506 = vadd.f32 %v1480, 1.0
        %v1507 = vadd.f32 %v1482, 1.0
        %v1508 = vadd.f32 %v1484, 1.0
        %v1509 = vadd.f32 %v1486, 1.0
        %v1510 = vadd.f32 %v1488, 1.0
        %v1511 = vadd.f32 %v1490, 1.0
        %v1512 = vadd.f32 %v1492, 1.0
        %v1513 = vadd.f32 %v1494, 1.0
        %v1514 = vadd.f32 %v1496, 1.0
        %v1515 = vadd.f32 %v1498, 1.0
        %v1516 = vadd.f32 %v1500, 1.0
        %v1517 = vrcp.pop %v1501
        %v1518 = vmul.f32 1.0, %v1517
        %v1519 = vrcp.pop %v1502
        %v1520 = vmul.f32 1.0, %v1519
        %v1521 = vrcp.pop %v1503
        %v1522 = vmul.f32 1.0, %v1521
        %v1523 = vrcp.pop %v1504
        %v1524 = vmul.f32 1.0, %v1523
        %v1525 = vrcp.pop %v1505
        %v1526 = vmul.f32 1.0, %v1525
        %v1527 = vrcp.pop %v1506
        %v1528 = vmul.f32 1.0, %v1527
        %v1529 = vrcp.pop %v1507
        %v1530 = vmul.f32 1.0, %v1529
        %v1531 = vrcp.pop %v1508
        %v1532 = vmul.f32 1.0, %v1531
        %v1533 = vrcp.pop %v1509
        %v1534 = vmul.f32 1.0, %v1533
        %v1535 = vrcp.pop %v1510
        %v1536 = vmul.f32 1.0, %v1535
        %v1537 = vrcp.pop %v1511
        %v1538 = vmul.f32 1.0, %v1537
        %v1539 = vrcp.pop %v1512
        %v1540 = vmul.f32 1.0, %v1539
        %v1541 = vrcp.pop %v1513
        %v1542 = vmul.f32 1.0, %v1541
        %v1543 = vrcp.pop %v1514
        %v1544 = vmul.f32 1.0, %v1543
        %v1545 = vrcp.pop %v1515
        %v1546 = vmul.f32 1.0, %v1545
        %v1547 = vrcp.pop %v1516
        %v1548 = vmul.f32 1.0, %v1547
        %v1549 = vmul.f32 %v1406, %v1437
        %v1550 = vmul.f32 %v1408, %v1438
        %v1551 = vmul.f32 %v1410, %v1439
        %v1552 = vmul.f32 %v1412, %v1440
        %v1553 = vmul.f32 %v1414, %v1441
        %v1554 = vmul.f32 %v1416, %v1442
        %v1555 = vmul.f32 %v1418, %v1443
        %v1556 = vmul.f32 %v1420, %v1444
        %v1557 = vmul.f32 %v1422, %v1445
        %v1558 = vmul.f32 %v1424, %v1446
        %v1559 = vmul.f32 %v1426, %v1447
        %v1560 = vmul.f32 %v1428, %v1448
        %v1561 = vmul.f32 %v1430, %v1449
        %v1562 = vmul.f32 %v1432, %v1450
        %v1563 = vmul.f32 %v1434, %v1451
        %v1564 = vmul.f32 %v1436, %v1452
        %v1565 = vtanh.pop %v1549
        %v1566 = vtanh.pop %v1550
        %v1567 = vtanh.pop %v1551
        %v1568 = vtanh.pop %v1552
        %v1569 = vtanh.pop %v1553
        %v1570 = vtanh.pop %v1554
        %v1571 = vtanh.pop %v1555
        %v1572 = vtanh.pop %v1556
        %v1573 = vtanh.pop %v1557
        %v1574 = vtanh.pop %v1558
        %v1575 = vtanh.pop %v1559
        %v1576 = vtanh.pop %v1560
        %v1577 = vtanh.pop %v1561
        %v1578 = vtanh.pop %v1562
        %v1579 = vtanh.pop %v1563
        %v1580 = vtanh.pop %v1564
        %v1581 = vmul.f32 %v1518, %v1565
        %v1582 = vmul.f32 %v1520, %v1566
        %v1583 = vmul.f32 %v1522, %v1567
        %v1584 = vmul.f32 %v1524, %v1568
        %v1585 = vmul.f32 %v1526, %v1569
        %v1586 = vmul.f32 %v1528, %v1570
        %v1587 = vmul.f32 %v1530, %v1571
        %v1588 = vmul.f32 %v1532, %v1572
        %v1589 = vmul.f32 %v1534, %v1573
        %v1590 = vmul.f32 %v1536, %v1574
        %v1591 = vmul.f32 %v1538, %v1575
        %v1592 = vmul.f32 %v1540, %v1576
        %v1593 = vmul.f32 %v1542, %v1577
        %v1594 = vmul.f32 %v1544, %v1578
        %v1595 = vmul.f32 %v1546, %v1579
        %v1596 = vmul.f32 %v1548, %v1580
        %v1597 = vpack.c.bf16 %v1582, %v1581
        %v1598 = vpack.c.bf16 %v1584, %v1583
        %v1599 = vpack.c.bf16 %v1586, %v1585
        %v1600 = vpack.c.bf16 %v1588, %v1587
        %v1601 = vpack.c.bf16 %v1590, %v1589
        %v1602 = vpack.c.bf16 %v1592, %v1591
        %v1603 = vpack.c.bf16 %v1594, %v1593
        %v1604 = vpack.c.bf16 %v1596, %v1595
        %v1605 = vld [vmem:[#allocation6] sm:$0xf]
        %v1606 = vld [vmem:[#allocation6 + $0x4] sm:$0xf]
        %v1607 = vld [vmem:[#allocation6 + $0x8] sm:$0xf]
        %v1608 = vld [vmem:[#allocation6 + $0xc] sm:$0xf]
        %v1609 = vld [vmem:[#allocation6 + $0x10] sm:$0xf]
        %v1610 = vld [vmem:[#allocation6 + $0x14] sm:$0xf]
        %v1611 = vld [vmem:[#allocation6 + $0x18] sm:$0xf]
        %v1612 = vld [vmem:[#allocation6 + $0x1c] sm:$0xf]
        %v1613 = vld [vmem:[#allocation6 + $0x20] sm:$0xf]
        %v1614 = vld [vmem:[#allocation6 + $0x24] sm:$0xf]
        %v1615 = vld [vmem:[#allocation6 + $0x28] sm:$0xf]
        %v1616 = vld [vmem:[#allocation6 + $0x2c] sm:$0xf]
        %v1617 = vld [vmem:[#allocation6 + $0x30] sm:$0xf]
        %v1618 = vld [vmem:[#allocation6 + $0x34] sm:$0xf]
        %v1619 = vld [vmem:[#allocation6 + $0x38] sm:$0xf]
        %v1620 = vld [vmem:[#allocation6 + $0x3c] sm:$0xf]
        %v1621 = vld [vmem:[%s4] sm:$0x1]
        %v1623 = vlaneseq
        %v1624 = vshrl.u32 %v1623, 7
        %v1625 = vsub.s32 0, %v1624
        %v1626 = vrot.slane %v1621, %v1625
        %v1644 = vunpack.c.l.b16 %v1605
        %v1645 = vunpack.c.l.b16 %v1606
        %v1646 = vunpack.c.l.b16 %v1607
        %v1647 = vunpack.c.l.b16 %v1608
        %v1648 = vunpack.c.l.b16 %v1609
        %v1649 = vunpack.c.l.b16 %v1610
        %v1650 = vunpack.c.l.b16 %v1611
        %v1651 = vunpack.c.l.b16 %v1612
        %v1652 = vunpack.c.l.b16 %v1613
        %v1653 = vunpack.c.l.b16 %v1614
        %v1654 = vunpack.c.l.b16 %v1615
        %v1655 = vunpack.c.l.b16 %v1616
        %v1656 = vunpack.c.l.b16 %v1617
        %v1657 = vunpack.c.l.b16 %v1618
        %v1658 = vunpack.c.l.b16 %v1619
        %v1659 = vunpack.c.l.b16 %v1620
        %v1660 = vpack.c.b16 %v1645, %v1644
        %v1661 = vpack.c.b16 %v1647, %v1646
        %v1662 = vpack.c.b16 %v1649, %v1648
        %v1663 = vpack.c.b16 %v1651, %v1650
        %v1664 = vpack.c.b16 %v1653, %v1652
        %v1665 = vpack.c.b16 %v1655, %v1654
        %v1666 = vpack.c.b16 %v1657, %v1656
        %v1667 = vpack.c.b16 %v1659, %v1658
        %1676 = vmatprep.subr.bf16.mxu0 0
        %1677 = vmatpush1.bf16.msra.mxu0 %v1660
        %1678 = vmatprep.subr.bf16.mxu0 0
        %1679 = vmatpush1.bf16.msra.mxu0 %v1661
        %1680 = vmatprep.subr.bf16.mxu0 0
        %1681 = vmatpush1.bf16.msra.mxu0 %v1662
        %1682 = vmatprep.subr.bf16.mxu0 0
        %1683 = vmatpush1.bf16.msra.mxu0 %v1663
        %1684 = vmatprep.subr.bf16.mxu0 0
        %1685 = vmatpush1.bf16.msra.mxu0 %v1664
        %1686 = vmatprep.subr.bf16.mxu0 0
        %1687 = vmatpush1.bf16.msra.mxu0 %v1665
        %1688 = vmatprep.subr.bf16.mxu0 0
        %1689 = vmatpush1.bf16.msra.mxu0 %v1666
        %1690 = vmatprep.subr.bf16.mxu0 0
        %1691 = vmatpush1.bf16.msra.mxu0 %v1667
        %1692 = vmatprep.subr.bf16.mxu0 0
        %1693 = vmatpush1.bf16.msra.mxu0 0
        %1694 = vmatprep.subr.bf16.mxu0 0
        %1695 = vmatpush1.bf16.msra.mxu0 0
        %1696 = vmatprep.subr.bf16.mxu0 0
        %1697 = vmatpush1.bf16.msra.mxu0 0
        %1698 = vmatprep.subr.bf16.mxu0 0
        %1699 = vmatpush1.bf16.msra.mxu0 0
        %1700 = vmatprep.subr.bf16.mxu0 0
        %1701 = vmatpush1.bf16.msra.mxu0 0
        %1702 = vmatprep.subr.bf16.mxu0 0
        %1703 = vmatpush1.bf16.msra.mxu0 0
        %1704 = vmatprep.subr.bf16.mxu0 0
        %1705 = vmatpush1.bf16.msra.mxu0 0
        %1706 = vmatprep.subr.bf16.mxu0 0
        %1707 = vmatpush1.bf16.msra.mxu0 0
        %1708 = vmatprep.mubr.bf16.mxu0 0
        %1709 = vmatmul.mubr.bf16.gmra.mrb[0].mxu0 %v1597
        %v1710 = vpop.f32.mrb[0].mxu0
        %v1711 = vadd.f32 %v1626, %v1710
        %v1712 = vpop.f32.mrb[0].mxu0
        %v1713 = vpop.f32.mrb[0].mxu0
        %v1714 = vadd.f32 %v1626, %v1713
        %v1715 = vpop.f32.mrb[0].mxu0
        %1716 = vmatprep.mubr.bf16.mxu0 0
        %1717 = vmatmul.mubr.bf16.gmra.mrb[0].mxu0 %v1598
        %v1718 = vpop.f32.mrb[0].mxu0
        %v1719 = vadd.f32 %v1626, %v1718
        %v1720 = vpop.f32.mrb[0].mxu0
        %v1721 = vpop.f32.mrb[0].mxu0
        %v1722 = vadd.f32 %v1626, %v1721
        %v1723 = vpop.f32.mrb[0].mxu0
        %1724 = vmatprep.mubr.bf16.mxu0 0
        %1725 = vmatmul.mubr.bf16.gmra.mrb[0].mxu0 %v1599
        %v1726 = vpop.f32.mrb[0].mxu0
        %v1727 = vadd.f32 %v1626, %v1726
        %v1728 = vpop.f32.mrb[0].mxu0
        %v1729 = vpop.f32.mrb[0].mxu0
        %v1730 = vadd.f32 %v1626, %v1729
        %v1731 = vpop.f32.mrb[0].mxu0
        %1732 = vmatprep.mubr.bf16.mxu0 0
        %1733 = vmatmul.mubr.bf16.gmra.mrb[0].mxu0 %v1600
        %v1734 = vpop.f32.mrb[0].mxu0
        %v1735 = vadd.f32 %v1626, %v1734
        %v1736 = vpop.f32.mrb[0].mxu0
        %v1737 = vpop.f32.mrb[0].mxu0
        %v1738 = vadd.f32 %v1626, %v1737
        %v1739 = vpop.f32.mrb[0].mxu0
        %1740 = vmatprep.mubr.bf16.mxu0 0
        %1741 = vmatmul.mubr.bf16.gmra.mrb[0].mxu0 %v1601
        %v1742 = vpop.f32.mrb[0].mxu0
        %v1743 = vadd.f32 %v1626, %v1742
        %v1744 = vpop.f32.mrb[0].mxu0
        %v1745 = vpop.f32.mrb[0].mxu0
        %v1746 = vadd.f32 %v1626, %v1745
        %v1747 = vpop.f32.mrb[0].mxu0
        %1748 = vmatprep.mubr.bf16.mxu0 0
        %1749 = vmatmul.mubr.bf16.gmra.mrb[0].mxu0 %v1602
        %v1750 = vpop.f32.mrb[0].mxu0
        %v1751 = vadd.f32 %v1626, %v1750
        %v1752 = vpop.f32.mrb[0].mxu0
        %v1753 = vpop.f32.mrb[0].mxu0
        %v1754 = vadd.f32 %v1626, %v1753
        %v1755 = vpop.f32.mrb[0].mxu0
        %1756 = vmatprep.mubr.bf16.mxu0 0
        %1757 = vmatmul.mubr.bf16.gmra.mrb[0].mxu0 %v1603
        %v1758 = vpop.f32.mrb[0].mxu0
        %v1759 = vadd.f32 %v1626, %v1758
        %v1760 = vpop.f32.mrb[0].mxu0
        %v1761 = vpop.f32.mrb[0].mxu0
        %v1762 = vadd.f32 %v1626, %v1761
        %v1763 = vpop.f32.mrb[0].mxu0
        %1764 = vmatprep.mubr.bf16.mxu0 0
        %1765 = vmatmul.mubr.bf16.gmra.mrb[0].mxu0 %v1604
        %v1766 = vpop.f32.mrb[0].mxu0
        %v1767 = vadd.f32 %v1626, %v1766
        %v1768 = vpop.f32.mrb[0].mxu0
        %v1769 = vpop.f32.mrb[0].mxu0
        %v1770 = vadd.f32 %v1626, %v1769
        %v1771 = vpop.f32.mrb[0].mxu0
        %1772 = vdwg.mxu0
        %1773 = vst [vmem:[%s274] sm:$0xff] %v1711
        %1774 = vst [vmem:[%s274 + $0x8] sm:$0xff] %v1714
        %1775 = vst [vmem:[%s274 + $0x10] sm:$0xff] %v1719
        %1776 = vst [vmem:[%s274 + $0x18] sm:$0xff] %v1722
        %1777 = vst [vmem:[%s274 + $0x20] sm:$0xff] %v1727
        %1778 = vst [vmem:[%s274 + $0x28] sm:$0xff] %v1730
        %1779 = vst [vmem:[%s274 + $0x30] sm:$0xff] %v1735
        %1780 = vst [vmem:[%s274 + $0x38] sm:$0xff] %v1738
        %1781 = vst [vmem:[%s274 + $0x40] sm:$0xff] %v1743
        %1782 = vst [vmem:[%s274 + $0x48] sm:$0xff] %v1746
        %1783 = vst [vmem:[%s274 + $0x50] sm:$0xff] %v1751
        %1784 = vst [vmem:[%s274 + $0x58] sm:$0xff] %v1754
        %1785 = vst [vmem:[%s274 + $0x60] sm:$0xff] %v1759
        %1786 = vst [vmem:[%s274 + $0x68] sm:$0xff] %v1762
        %1787 = vst [vmem:[%s274 + $0x70] sm:$0xff] %v1767
        %1788 = vst [vmem:[%s274 + $0x78] sm:$0xff] %v1770
        %s1789 = smul.u32 16, %s20
        %p1790 = scmp.lt.s32.totalorder %s1789, 31
        %s1791 = scalar_select %p1790, %s1789, 31
        %s1792 = smul.addr %s1791, 8
        %s1793 = scalar_lea.vmem %s5, %s1792
        // Predicated region
        $region53: #{lstm_forward.1} parent=39 // pred_check
          %p1794 = pneg %p148
        $region54: #{lstm_forward.1} parent=39 // pred_check_branch
          %1796 = sbr.rel (%p1794) target = $region56
        $region55: #{lstm_forward.1} parent=39 // pred_region
          %s1797 = smul.u32 16, %s20
        $region56: #{lstm_forward.1} parent=39 // pred_fallthru
          _
      $region40: #{lstm_forward.1} parent=5 // pred_fallthru
        _
      %p1798 = scmp.le.s32.totalorder 2, %s15
      // Predicated region
      $region57: #{lstm_forward.1} parent=5 // pred_check
        %p1799 = pneg %p1798
      $region58: #{lstm_forward.1} parent=5 // pred_check_branch
        %1801 = sbr.rel (%p1799) target = $region60
      $region59: #{lstm_forward.1} parent=5 // pred_region
        %s1802 = ssub.s32 %s15, 2
        // Predicated region
        $region61: #{lstm_forward.1} parent=59 // pred_check
          %p1803 = pneg %p154
        $region62: #{lstm_forward.1} parent=59 // pred_check_branch
          %1805 = sbr.rel (%p1803) target = $region64
        $region63: #{lstm_forward.1} parent=59 // pred_region
          %s1806 = smul.u32 16, %s21
          %p1807 = scmp.lt.s32.totalorder %s1806, 31
          %s1808 = scalar_select %p1807, %s1806, 31
          %s1809 = smul.addr %s1808, 8
          %s1810 = scalar_lea.vmem %s5, %s1809
        $region64: #{lstm_forward.1} parent=59 // pred_fallthru
          _
      $region60: #{lstm_forward.1} parent=5 // pred_fallthru
        _
    $region6: #{lstm_forward.1} parent=1 // loop_footer
      %s19 = sadd.s32 1, %s15
    $region7: #{lstm_forward.1} parent=1 // loop_footer_branch
      %14 = sbr.rel target = $region3
    $region8: #{lstm_forward.1} parent=1 // loop_exit
      _
    %1811 = vsyncpa [#allocation3], 1
    %s1812 = scalar_lea.sflag [#allocation3], 1
    %1813 = vsyncpa %s1812, 1
    %1814 = vsyncpa [#allocation5], 1

</llo_original>
